<compile_context>
chip_gen: v5e
topology: v5e:2x2
jax: 0.10.0
libtpu: 0.0.40
codegen_flags: <defaults>
</compile_context>

<pallas_src>
import math
import functools

import jax
import jax.numpy as jnp
from jax import lax
from jax.experimental import pallas as pl
from jax.experimental.pallas import tpu as pltpu


def _layernorm(x, gamma, beta, eps=1e-12):
    mu = jnp.mean(x, axis=-1, keepdims=True)
    xc = x - mu
    var = jnp.mean(xc * xc, axis=-1, keepdims=True)
    return xc * lax.rsqrt(var + eps) * gamma + beta


def _encoder_kernel(num_heads, head_dim,
                    x_ref, mask_ref,
                    wqkv_ref, bqkv_ref, wo_ref, bo_ref,
                    g1_ref, b1_ref,
                    wf1_ref, bf1_ref, wf2_ref, bf2_ref,
                    g2_ref, b2_ref,
                    o_ref, ctx_ref):
    Bt, S, H = x_ref.shape
    R = Bt * S
    scale = 1.0 / math.sqrt(head_dim)

    x = x_ref[...].reshape(R, H)                       # collapse leading dims (f32)

    # --- fused QKV projection: one full-width matmul, bf16 in / f32 acc ---
    qkv = jnp.dot(x.astype(jnp.bfloat16), wqkv_ref[...],
                  preferred_element_type=jnp.float32) + bqkv_ref[...]
    q = (qkv[:, :H] * scale).reshape(Bt, S, H)          # scale hoisted out of heads
    k = qkv[:, H:2 * H].reshape(Bt, S, H)
    v = qkv[:, 2 * H:].reshape(Bt, S, H)

    mask_add = mask_ref[...]                             # (Bt, 1, S), hoisted once

    # --- per-head scaled dot-product attention (score matmuls are inherently
    #     head_dim wide; projections above are already fused full-width) ---
    for h in range(num_heads):
        sl = slice(h * head_dim, (h + 1) * head_dim)
        s = jnp.einsum('bqd,bkd->bqk', q[:, :, sl], k[:, :, sl],
                       preferred_element_type=jnp.float32)        # (Bt, S, S)
        s = s + mask_add                                           # key padding
        m = jnp.max(s, axis=-1, keepdims=True)
        e = jnp.exp(s - m)
        pr = e * pl.reciprocal(jnp.sum(e, axis=-1, keepdims=True), approx=True)
        ctx_ref[:, :, sl] = jnp.einsum('bqk,bkd->bqd', pr, v[:, :, sl],
                                       preferred_element_type=jnp.float32)

    ctx = ctx_ref[...].reshape(R, H)

    # --- single full-width output projection (no per-head accumulate) ---
    attn = jnp.dot(ctx.astype(jnp.bfloat16), wo_ref[...],
                   preferred_element_type=jnp.float32) + bo_ref[...]

    # --- LayerNorm 1 (f32) ---
    h1 = _layernorm(attn, g1_ref[...], b1_ref[...])

    # --- feed-forward: Linear -> ReLU -> Linear (dropout = identity) ---
    f = jnp.dot(h1.astype(jnp.bfloat16), wf1_ref[...],
                preferred_element_type=jnp.float32) + bf1_ref[...]
    f = jnp.maximum(f, 0.0)
    f = jnp.dot(f.astype(jnp.bfloat16), wf2_ref[...],
                preferred_element_type=jnp.float32) + bf2_ref[...]

    # --- LayerNorm 2 (f32) ---
    y = _layernorm(f, g2_ref[...], b2_ref[...])
    o_ref[...] = y.reshape(Bt, S, H).astype(o_ref.dtype)


def encoder_layer(x, mask_add, p, num_heads):
    """One Encoder layer. x: (B, S, H) f32, mask_add: (B, 1, S) f32 additive mask."""
    B, S, H = x.shape
    I = p["wf1"].shape[1]
    head_dim = H // num_heads

    weights = (p["wqkv"], p["bqkv"], p["wo"], p["bo"], p["g1"], p["b1"],
               p["wf1"], p["bf1"], p["wf2"], p["bf2"], p["g2"], p["b2"])
    weight_bytes = sum(int(w.size) * w.dtype.itemsize for w in weights)

    # Batch tile: as many batch elements per grid step as fit a VMEM budget
    # (weights are resident once; activations ~ triple-buffered slack).
    per_elem = 3 * 4 * S * (6 * H + I + num_heads * S)
    budget = 40 * 1024 * 1024 - 2 * weight_bytes
    Bt = max(1, min(B, max(budget, per_elem) // per_elem))
    while B % Bt:
        Bt -= 1
    grid = (B // Bt,)

    act_bytes = per_elem * Bt
    vmem_limit = int(min(max(2 * weight_bytes + act_bytes + (4 << 20), 32 << 20),
                         96 << 20))

    cost = pl.CostEstimate(
        flops=int(2 * B * S * H * (4 * H + 2 * I)
                  + 4 * B * num_heads * S * S * head_dim),
        transcendentals=int(B * num_heads * S * S + 3 * B * S),
        bytes_accessed=int(2 * 4 * B * S * H + 4 * B * S + weight_bytes),
    )

    def const_spec(arr):                                  # whole array, every step
        n = arr.ndim
        return pl.BlockSpec(arr.shape, lambda b, _n=n: (0,) * _n)

    kernel = functools.partial(_encoder_kernel, num_heads, head_dim)

    return pl.pallas_call(
        kernel,
        out_shape=jax.ShapeDtypeStruct((B, S, H), jnp.float32),
        grid=grid,
        in_specs=[
            pl.BlockSpec((Bt, S, H), lambda b: (b, 0, 0)),   # activations
            pl.BlockSpec((Bt, 1, S), lambda b: (b, 0, 0)),   # additive mask
        ] + [const_spec(w) for w in weights],
        out_specs=pl.BlockSpec((Bt, S, H), lambda b: (b, 0, 0)),
        scratch_shapes=[pltpu.VMEM((Bt, S, H), jnp.float32)],  # per-head ctx slab
        compiler_params=pltpu.CompilerParams(
            dimension_semantics=("parallel",),               # batch tiles independent
            vmem_limit_bytes=vmem_limit,
        ),
        cost_estimate=cost,
    )(x, mask_add, *weights)
    # TODO(synk): for H < 128 a lane-dense (Bt, S*H) output slab would avoid
    # masked partial stores; skipped here to keep in-kernel layout reshapes trivial.


def transformer_forward(input_ids, prep, config):
    B, S = input_ids.shape
    pos = jnp.arange(S, dtype=jnp.int32)
    # Embedding lookup is a data-dependent gather (kept in plain JAX); the
    # positional add / dropout(eval)=identity feed straight into the kernels.
    x = prep["word_emb"][input_ids] + prep["pos_emb"][pos][None, :, :]   # (B,S,H)
    # Finite additive key-padding mask (avoids NaN for fully padded rows).
    mask_add = jnp.where(input_ids == config["pad_token_id"], -1e30, 0.0)
    mask_add = mask_add.astype(jnp.float32)[:, None, :]                  # (B,1,S)
    for layer in prep["layers"]:
        x = encoder_layer(x, mask_add, layer, config["num_heads"])
    return x


def prepare_params(params, config):
    """One-time layout transform: PyTorch-convention weights -> matmul-ready
    (kernel) layout; matmul weights in bf16, biases / LN params in f32."""
    prep = {"word_emb": params["word_emb"], "pos_emb": params["pos_emb"], "layers": []}
    for p in params["layers"]:
        prep["layers"].append({
            "wqkv": p["in_proj_w"].T.astype(jnp.bfloat16),            # (H, 3H)
            "bqkv": p["in_proj_b"].reshape(1, -1).astype(jnp.float32),
            "wo":   p["out_proj_w"].T.astype(jnp.bfloat16),           # (H, H)
            "bo":   p["out_proj_b"].reshape(1, -1).astype(jnp.float32),
            "g1":   p["ln1_g"].reshape(1, -1).astype(jnp.float32),
            "b1":   p["ln1_b"].reshape(1, -1).astype(jnp.float32),
            "wf1":  p["ff1_w"].T.astype(jnp.bfloat16),                # (H, I)
            "bf1":  p["ff1_b"].reshape(1, -1).astype(jnp.float32),
            "wf2":  p["ff2_w"].T.astype(jnp.bfloat16),                # (I, H)
            "bf2":  p["ff2_b"].reshape(1, -1).astype(jnp.float32),
            "g2":   p["ln2_g"].reshape(1, -1).astype(jnp.float32),
            "b2":   p["ln2_b"].reshape(1, -1).astype(jnp.float32),
        })
    return prep


def init_params(key, config):
    V, T, H, I, L = (config["vocab_size"], config["max_token_len"],
                     config["hidden_dim"], config["intermediate_dim"],
                     config["num_layers"])
    keys = jax.random.split(key, 2 + L)
    params = {
        "word_emb": 0.02 * jax.random.normal(keys[0], (V, H), jnp.float32),
        "pos_emb": 0.02 * jax.random.normal(keys[1], (T, H), jnp.float32),
        "layers": [],
    }
    for l in range(L):
        ks = jax.random.split(keys[2 + l], 8)
        params["layers"].append({
            "in_proj_w":  0.05 * jax.random.normal(ks[0], (3 * H, H), jnp.float32),
            "in_proj_b":  0.01 * jax.random.normal(ks[1], (3 * H,), jnp.float32),
            "out_proj_w": 0.05 * jax.random.normal(ks[2], (H, H), jnp.float32),
            "out_proj_b": 0.01 * jax.random.normal(ks[3], (H,), jnp.float32),
            "ln1_g": jnp.ones((H,), jnp.float32),
            "ln1_b": jnp.zeros((H,), jnp.float32),
            "ff1_w": 0.05 * jax.random.normal(ks[4], (I, H), jnp.float32),
            "ff1_b": 0.01 * jax.random.normal(ks[5], (I,), jnp.float32),
            "ff2_w": 0.05 * jax.random.normal(ks[6], (H, I), jnp.float32),
            "ff2_b": 0.01 * jax.random.normal(ks[7], (H,), jnp.float32),
            "ln2_g": jnp.ones((H,), jnp.float32),
            "ln2_b": jnp.zeros((H,), jnp.float32),
        })
    return params


def _reference_forward(input_ids, prep, config):
    """Plain-JAX reference mirroring the kernel math (same bf16 matmul casts)."""
    B, S = input_ids.shape
    H = config["hidden_dim"]
    nh = config["num_heads"]
    hd = H // nh
    scale = 1.0 / math.sqrt(hd)

    def ln(v, g, b, eps=1e-12):
        mu = jnp.mean(v, -1, keepdims=True)
        vc = v - mu
        var = jnp.mean(vc * vc, -1, keepdims=True)
        return vc * lax.rsqrt(var + eps) * g + b

    pos = jnp.arange(S, dtype=jnp.int32)
    x = prep["word_emb"][input_ids] + prep["pos_emb"][pos][None, :, :]
    mask_add = jnp.where(input_ids == config["pad_token_id"], -1e30, 0.0)
    mask_add = mask_add.astype(jnp.float32)[:, None, None, :]            # (B,1,1,S)

    for p in prep["layers"]:
        xb = x.reshape(B * S, H).astype(jnp.bfloat16)
        qkv = jnp.dot(xb, p["wqkv"], preferred_element_type=jnp.float32) + p["bqkv"]
        q = (qkv[:, :H] * scale).reshape(B, S, nh, hd)
        k = qkv[:, H:2 * H].reshape(B, S, nh, hd)
        v = qkv[:, 2 * H:].reshape(B, S, nh, hd)
        s = jnp.einsum('bqhd,bkhd->bhqk', q, k) + mask_add
        pr = jax.nn.softmax(s, axis=-1)
        ctx = jnp.einsum('bhqk,bkhd->bqhd', pr, v).reshape(B * S, H)
        attn = jnp.dot(ctx.astype(jnp.bfloat16), p["wo"],
                       preferred_element_type=jnp.float32) + p["bo"]
        h1 = ln(attn, p["g1"], p["b1"])
        f = jnp.dot(h1.astype(jnp.bfloat16), p["wf1"],
                    preferred_element_type=jnp.float32) + p["bf1"]
        f = jnp.maximum(f, 0.0)
        f = jnp.dot(f.astype(jnp.bfloat16), p["wf2"],
                    preferred_element_type=jnp.float32) + p["bf2"]
        x = ln(f, p["g2"], p["b2"]).reshape(B, S, H)
    return x


if __name__ == "__main__":
    config = dict(vocab_size=50, max_token_len=16, hidden_dim=32,
                  intermediate_dim=64, num_heads=4, num_layers=2,
                  dropout_prob=0.1, pad_token_id=0)

    key = jax.random.PRNGKey(0)
    pkey, dkey = jax.random.split(key)
    params = init_params(pkey, config)
    prep = prepare_params(params, config)          # one-time weight layout transform

    B, S = 2, 8
    input_ids = jax.random.randint(dkey, (B, S), 1, config["vocab_size"], dtype=jnp.int32)
    input_ids = input_ids.at[1, -2:].set(config["pad_token_id"])   # some padding tokens

    @jax.jit
    def fwd(ids, prm):
        return transformer_forward(ids, prm, config)

    out = jax.block_until_ready(fwd(input_ids, prep))

    assert out.shape == (B, S, config["hidden_dim"]), out.shape
    assert bool(jnp.all(jnp.isfinite(out)))

    ref = _reference_forward(input_ids, prep, config)
    max_err = float(jnp.max(jnp.abs(out - ref)))
    assert max_err < 5e-2, f"max abs err vs reference: {max_err}"

    print("KERNEL_OK")
</pallas_src>

<mosaic_0001>
module attributes {stable_mosaic.version = 11 : i64} {
  func.func @_encoder_kernel(%arg0: i32, %arg1: memref<2x8x32xf32, #tpu.memory_space<vmem>>, %arg2: memref<2x1x8xf32, #tpu.memory_space<vmem>>, %arg3: memref<32x96xbf16, #tpu.memory_space<vmem>>, %arg4: memref<1x96xf32, #tpu.memory_space<vmem>>, %arg5: memref<32x32xbf16, #tpu.memory_space<vmem>>, %arg6: memref<1x32xf32, #tpu.memory_space<vmem>>, %arg7: memref<1x32xf32, #tpu.memory_space<vmem>>, %arg8: memref<1x32xf32, #tpu.memory_space<vmem>>, %arg9: memref<32x64xbf16, #tpu.memory_space<vmem>>, %arg10: memref<1x64xf32, #tpu.memory_space<vmem>>, %arg11: memref<64x32xbf16, #tpu.memory_space<vmem>>, %arg12: memref<1x32xf32, #tpu.memory_space<vmem>>, %arg13: memref<1x32xf32, #tpu.memory_space<vmem>>, %arg14: memref<1x32xf32, #tpu.memory_space<vmem>>, %arg15: memref<2x8x32xf32, #tpu.memory_space<vmem>>, %arg16: memref<2x8x32xf32, #tpu.memory_space<vmem>>) attributes {dimension_semantics = [#tpu.dimension_semantics<parallel>], iteration_bounds = array<i64: 1>, scalar_prefetch = 0 : i64, scratch_operands = 1 : i64, tpu.core_type = #tpu.core_type<tc>, window_params = [{transform_indices = @transform_0, window_bounds = array<i64: 2, 8, 32>}, {transform_indices = @transform_1, window_bounds = array<i64: 2, 1, 8>}, {pipeline_mode = #tpu.pipeline_mode<synchronous>, transform_indices = @transform_2, window_bounds = array<i64: 32, 96>}, {pipeline_mode = #tpu.pipeline_mode<synchronous>, transform_indices = @transform_3, window_bounds = array<i64: 1, 96>}, {pipeline_mode = #tpu.pipeline_mode<synchronous>, transform_indices = @transform_4, window_bounds = array<i64: 32, 32>}, {pipeline_mode = #tpu.pipeline_mode<synchronous>, transform_indices = @transform_5, window_bounds = array<i64: 1, 32>}, {pipeline_mode = #tpu.pipeline_mode<synchronous>, transform_indices = @transform_6, window_bounds = array<i64: 1, 32>}, {pipeline_mode = #tpu.pipeline_mode<synchronous>, transform_indices = @transform_7, window_bounds = array<i64: 1, 32>}, {pipeline_mode = #tpu.pipeline_mode<synchronous>, transform_indices = @transform_8, window_bounds = array<i64: 32, 64>}, {pipeline_mode = #tpu.pipeline_mode<synchronous>, transform_indices = @transform_9, window_bounds = array<i64: 1, 64>}, {pipeline_mode = #tpu.pipeline_mode<synchronous>, transform_indices = @transform_10, window_bounds = array<i64: 64, 32>}, {pipeline_mode = #tpu.pipeline_mode<synchronous>, transform_indices = @transform_11, window_bounds = array<i64: 1, 32>}, {pipeline_mode = #tpu.pipeline_mode<synchronous>, transform_indices = @transform_12, window_bounds = array<i64: 1, 32>}, {pipeline_mode = #tpu.pipeline_mode<synchronous>, transform_indices = @transform_13, window_bounds = array<i64: 1, 32>}, {transform_indices = @transform_14, window_bounds = array<i64: 2, 8, 32>}]} {
    %c0 = arith.constant 0 : index
    %c0_0 = arith.constant 0 : index
    %c0_1 = arith.constant 0 : index
    %0 = vector.load %arg1[%c0, %c0_0, %c0_1] : memref<2x8x32xf32, #tpu.memory_space<vmem>>, vector<2x8x32xf32>
    %1 = vector.shape_cast %0 : vector<2x8x32xf32> to vector<16x32xf32>
    %2 = arith.truncf %1 : vector<16x32xf32> to vector<16x32xbf16>
    %c0_2 = arith.constant 0 : index
    %c0_3 = arith.constant 0 : index
    %3 = vector.load %arg3[%c0_2, %c0_3] : memref<32x96xbf16, #tpu.memory_space<vmem>>, vector<32x96xbf16>
    %cst = arith.constant dense<0.000000e+00> : vector<16x96xf32>
    %4 = tpu.matmul %2, %3, %cst {dimension_numbers = #tpu.dot_dimension_numbers<[1], [0], [0], [1], [0, 0, 1, 1], [], []>} : vector<16x32xbf16>, vector<32x96xbf16>, vector<16x96xf32> -> vector<16x96xf32>
    %c0_4 = arith.constant 0 : index
    %c0_5 = arith.constant 0 : index
    %5 = vector.load %arg4[%c0_4, %c0_5] : memref<1x96xf32, #tpu.memory_space<vmem>>, vector<1x96xf32>
    %6 = vector.broadcast %5 : vector<1x96xf32> to vector<16x96xf32>
    %7 = arith.addf %4, %6 : vector<16x96xf32>
    %8 = vector.extract_strided_slice %7 {offsets = [0, 0], sizes = [16, 32], strides = [1, 1]} : vector<16x96xf32> to vector<16x32xf32>
    %cst_6 = arith.constant 0.353553385 : f32
    %9 = vector.broadcast %cst_6 : f32 to vector<16x32xf32>
    %10 = arith.mulf %8, %9 : vector<16x32xf32>
    %11 = vector.shape_cast %10 : vector<16x32xf32> to vector<2x8x32xf32>
    %12 = vector.extract_strided_slice %7 {offsets = [0, 32], sizes = [16, 32], strides = [1, 1]} : vector<16x96xf32> to vector<16x32xf32>
    %13 = vector.shape_cast %12 : vector<16x32xf32> to vector<2x8x32xf32>
    %14 = vector.extract_strided_slice %7 {offsets = [0, 64], sizes = [16, 32], strides = [1, 1]} : vector<16x96xf32> to vector<16x32xf32>
    %15 = vector.shape_cast %14 : vector<16x32xf32> to vector<2x8x32xf32>
    %c0_7 = arith.constant 0 : index
    %c0_8 = arith.constant 0 : index
    %c0_9 = arith.constant 0 : index
    %16 = vector.load %arg2[%c0_7, %c0_8, %c0_9] : memref<2x1x8xf32, #tpu.memory_space<vmem>>, vector<2x1x8xf32>
    %17 = vector.extract_strided_slice %11 {offsets = [0, 0, 0], sizes = [2, 8, 8], strides = [1, 1, 1]} : vector<2x8x32xf32> to vector<2x8x8xf32>
    %18 = vector.extract_strided_slice %13 {offsets = [0, 0, 0], sizes = [2, 8, 8], strides = [1, 1, 1]} : vector<2x8x32xf32> to vector<2x8x8xf32>
    "tpu.trace_start"() <{level = 10 : i32, message = "bqd,bkd->bqk"}> : () -> ()
    %cst_10 = arith.constant dense<0.000000e+00> : vector<2x8x8xf32>
    %19 = tpu.matmul %17, %18, %cst_10 {dimension_numbers = #tpu.dot_dimension_numbers<[2], [2], [1], [1], [0, 0, 0, 1, 1, 1], [0], [0]>} : vector<2x8x8xf32>, vector<2x8x8xf32>, vector<2x8x8xf32> -> vector<2x8x8xf32>
    "tpu.trace_stop"() : () -> ()
    %20 = vector.broadcast %16 : vector<2x1x8xf32> to vector<2x8x8xf32>
    %21 = arith.addf %19, %20 : vector<2x8x8xf32>
    %cst_11 = arith.constant dense<0xFF800000> : vector<2x8xf32>
    %22 = vector.multi_reduction <maximumf>, %21, %cst_11 [2] : vector<2x8x8xf32> to vector<2x8xf32>
    %23 = vector.shape_cast %22 : vector<2x8xf32> to vector<2x8x1xf32>
    %24 = vector.broadcast %23 : vector<2x8x1xf32> to vector<2x8x8xf32>
    %25 = arith.subf %21, %24 : vector<2x8x8xf32>
    %26 = math.exp %25 : vector<2x8x8xf32>
    %cst_12 = arith.constant dense<0.000000e+00> : vector<2x8xf32>
    %27 = vector.multi_reduction <add>, %26, %cst_12 [2] : vector<2x8x8xf32> to vector<2x8xf32>
    %28 = vector.shape_cast %27 : vector<2x8xf32> to vector<2x8x1xf32>
    %29 = tpu.reciprocal %28 {approx = true} : vector<2x8x1xf32> -> vector<2x8x1xf32>
    %30 = vector.broadcast %29 : vector<2x8x1xf32> to vector<2x8x8xf32>
    %31 = arith.mulf %26, %30 : vector<2x8x8xf32>
    %32 = vector.extract_strided_slice %15 {offsets = [0, 0, 0], sizes = [2, 8, 8], strides = [1, 1, 1]} : vector<2x8x32xf32> to vector<2x8x8xf32>
    "tpu.trace_start"() <{level = 10 : i32, message = "bqk,bkd->bqd"}> : () -> ()
    %cst_13 = arith.constant dense<0.000000e+00> : vector<2x8x8xf32>
    %33 = tpu.matmul %31, %32, %cst_13 {dimension_numbers = #tpu.dot_dimension_numbers<[2], [1], [1], [2], [0, 0, 0, 1, 1, 2], [0], [0]>} : vector<2x8x8xf32>, vector<2x8x8xf32>, vector<2x8x8xf32> -> vector<2x8x8xf32>
    "tpu.trace_stop"() : () -> ()
    %c0_14 = arith.constant 0 : index
    %c0_15 = arith.constant 0 : index
    %c0_16 = arith.constant 0 : index
    %34 = vector.load %arg16[%c0_14, %c0_15, %c0_16] : memref<2x8x32xf32, #tpu.memory_space<vmem>>, vector<2x8x8xf32>
    tpu.vector_store %arg16[%c0_14, %c0_15, %c0_16], %33 {strides = array<i32>} : memref<2x8x32xf32, #tpu.memory_space<vmem>>, vector<2x8x8xf32>,
    %35 = vector.extract_strided_slice %11 {offsets = [0, 0, 8], sizes = [2, 8, 8], strides = [1, 1, 1]} : vector<2x8x32xf32> to vector<2x8x8xf32>
    %36 = vector.extract_strided_slice %13 {offsets = [0, 0, 8], sizes = [2, 8, 8], strides = [1, 1, 1]} : vector<2x8x32xf32> to vector<2x8x8xf32>
    "tpu.trace_start"() <{level = 10 : i32, message = "bqd,bkd->bqk"}> : () -> ()
    %cst_17 = arith.constant dense<0.000000e+00> : vector<2x8x8xf32>
    %37 = tpu.matmul %35, %36, %cst_17 {dimension_numbers = #tpu.dot_dimension_numbers<[2], [2], [1], [1], [0, 0, 0, 1, 1, 1], [0], [0]>} : vector<2x8x8xf32>, vector<2x8x8xf32>, vector<2x8x8xf32> -> vector<2x8x8xf32>
    "tpu.trace_stop"() : () -> ()
    %38 = vector.broadcast %16 : vector<2x1x8xf32> to vector<2x8x8xf32>
    %39 = arith.addf %37, %38 : vector<2x8x8xf32>
    %cst_18 = arith.constant dense<0xFF800000> : vector<2x8xf32>
    %40 = vector.multi_reduction <maximumf>, %39, %cst_18 [2] : vector<2x8x8xf32> to vector<2x8xf32>
    %41 = vector.shape_cast %40 : vector<2x8xf32> to vector<2x8x1xf32>
    %42 = vector.broadcast %41 : vector<2x8x1xf32> to vector<2x8x8xf32>
    %43 = arith.subf %39, %42 : vector<2x8x8xf32>
    %44 = math.exp %43 : vector<2x8x8xf32>
    %cst_19 = arith.constant dense<0.000000e+00> : vector<2x8xf32>
    %45 = vector.multi_reduction <add>, %44, %cst_19 [2] : vector<2x8x8xf32> to vector<2x8xf32>
    %46 = vector.shape_cast %45 : vector<2x8xf32> to vector<2x8x1xf32>
    %47 = tpu.reciprocal %46 {approx = true} : vector<2x8x1xf32> -> vector<2x8x1xf32>
    %48 = vector.broadcast %47 : vector<2x8x1xf32> to vector<2x8x8xf32>
    %49 = arith.mulf %44, %48 : vector<2x8x8xf32>
    %50 = vector.extract_strided_slice %15 {offsets = [0, 0, 8], sizes = [2, 8, 8], strides = [1, 1, 1]} : vector<2x8x32xf32> to vector<2x8x8xf32>
    "tpu.trace_start"() <{level = 10 : i32, message = "bqk,bkd->bqd"}> : () -> ()
    %cst_20 = arith.constant dense<0.000000e+00> : vector<2x8x8xf32>
    %51 = tpu.matmul %49, %50, %cst_20 {dimension_numbers = #tpu.dot_dimension_numbers<[2], [1], [1], [2], [0, 0, 0, 1, 1, 2], [0], [0]>} : vector<2x8x8xf32>, vector<2x8x8xf32>, vector<2x8x8xf32> -> vector<2x8x8xf32>
    "tpu.trace_stop"() : () -> ()
    %c0_21 = arith.constant 0 : index
    %c0_22 = arith.constant 0 : index
    %c8 = arith.constant 8 : index
    %52 = vector.load %arg16[%c0_21, %c0_22, %c8] : memref<2x8x32xf32, #tpu.memory_space<vmem>>, vector<2x8x8xf32>
    tpu.vector_store %arg16[%c0_21, %c0_22, %c8], %51 {strides = array<i32>} : memref<2x8x32xf32, #tpu.memory_space<vmem>>, vector<2x8x8xf32>,
    %53 = vector.extract_strided_slice %11 {offsets = [0, 0, 16], sizes = [2, 8, 8], strides = [1, 1, 1]} : vector<2x8x32xf32> to vector<2x8x8xf32>
    %54 = vector.extract_strided_slice %13 {offsets = [0, 0, 16], sizes = [2, 8, 8], strides = [1, 1, 1]} : vector<2x8x32xf32> to vector<2x8x8xf32>
    "tpu.trace_start"() <{level = 10 : i32, message = "bqd,bkd->bqk"}> : () -> ()
    %cst_23 = arith.constant dense<0.000000e+00> : vector<2x8x8xf32>
    %55 = tpu.matmul %53, %54, %cst_23 {dimension_numbers = #tpu.dot_dimension_numbers<[2], [2], [1], [1], [0, 0, 0, 1, 1, 1], [0], [0]>} : vector<2x8x8xf32>, vector<2x8x8xf32>, vector<2x8x8xf32> -> vector<2x8x8xf32>
    "tpu.trace_stop"() : () -> ()
    %56 = vector.broadcast %16 : vector<2x1x8xf32> to vector<2x8x8xf32>
    %57 = arith.addf %55, %56 : vector<2x8x8xf32>
    %cst_24 = arith.constant dense<0xFF800000> : vector<2x8xf32>
    %58 = vector.multi_reduction <maximumf>, %57, %cst_24 [2] : vector<2x8x8xf32> to vector<2x8xf32>
    %59 = vector.shape_cast %58 : vector<2x8xf32> to vector<2x8x1xf32>
    %60 = vector.broadcast %59 : vector<2x8x1xf32> to vector<2x8x8xf32>
    %61 = arith.subf %57, %60 : vector<2x8x8xf32>
    %62 = math.exp %61 : vector<2x8x8xf32>
    %cst_25 = arith.constant dense<0.000000e+00> : vector<2x8xf32>
    %63 = vector.multi_reduction <add>, %62, %cst_25 [2] : vector<2x8x8xf32> to vector<2x8xf32>
    %64 = vector.shape_cast %63 : vector<2x8xf32> to vector<2x8x1xf32>
    %65 = tpu.reciprocal %64 {approx = true} : vector<2x8x1xf32> -> vector<2x8x1xf32>
    %66 = vector.broadcast %65 : vector<2x8x1xf32> to vector<2x8x8xf32>
    %67 = arith.mulf %62, %66 : vector<2x8x8xf32>
    %68 = vector.extract_strided_slice %15 {offsets = [0, 0, 16], sizes = [2, 8, 8], strides = [1, 1, 1]} : vector<2x8x32xf32> to vector<2x8x8xf32>
    "tpu.trace_start"() <{level = 10 : i32, message = "bqk,bkd->bqd"}> : () -> ()
    %cst_26 = arith.constant dense<0.000000e+00> : vector<2x8x8xf32>
    %69 = tpu.matmul %67, %68, %cst_26 {dimension_numbers = #tpu.dot_dimension_numbers<[2], [1], [1], [2], [0, 0, 0, 1, 1, 2], [0], [0]>} : vector<2x8x8xf32>, vector<2x8x8xf32>, vector<2x8x8xf32> -> vector<2x8x8xf32>
    "tpu.trace_stop"() : () -> ()
    %c0_27 = arith.constant 0 : index
    %c0_28 = arith.constant 0 : index
    %c16 = arith.constant 16 : index
    %70 = vector.load %arg16[%c0_27, %c0_28, %c16] : memref<2x8x32xf32, #tpu.memory_space<vmem>>, vector<2x8x8xf32>
    tpu.vector_store %arg16[%c0_27, %c0_28, %c16], %69 {strides = array<i32>} : memref<2x8x32xf32, #tpu.memory_space<vmem>>, vector<2x8x8xf32>,
    %71 = vector.extract_strided_slice %11 {offsets = [0, 0, 24], sizes = [2, 8, 8], strides = [1, 1, 1]} : vector<2x8x32xf32> to vector<2x8x8xf32>
    %72 = vector.extract_strided_slice %13 {offsets = [0, 0, 24], sizes = [2, 8, 8], strides = [1, 1, 1]} : vector<2x8x32xf32> to vector<2x8x8xf32>
    "tpu.trace_start"() <{level = 10 : i32, message = "bqd,bkd->bqk"}> : () -> ()
    %cst_29 = arith.constant dense<0.000000e+00> : vector<2x8x8xf32>
    %73 = tpu.matmul %71, %72, %cst_29 {dimension_numbers = #tpu.dot_dimension_numbers<[2], [2], [1], [1], [0, 0, 0, 1, 1, 1], [0], [0]>} : vector<2x8x8xf32>, vector<2x8x8xf32>, vector<2x8x8xf32> -> vector<2x8x8xf32>
    "tpu.trace_stop"() : () -> ()
    %74 = vector.broadcast %16 : vector<2x1x8xf32> to vector<2x8x8xf32>
    %75 = arith.addf %73, %74 : vector<2x8x8xf32>
    %cst_30 = arith.constant dense<0xFF800000> : vector<2x8xf32>
    %76 = vector.multi_reduction <maximumf>, %75, %cst_30 [2] : vector<2x8x8xf32> to vector<2x8xf32>
    %77 = vector.shape_cast %76 : vector<2x8xf32> to vector<2x8x1xf32>
    %78 = vector.broadcast %77 : vector<2x8x1xf32> to vector<2x8x8xf32>
    %79 = arith.subf %75, %78 : vector<2x8x8xf32>
    %80 = math.exp %79 : vector<2x8x8xf32>
    %cst_31 = arith.constant dense<0.000000e+00> : vector<2x8xf32>
    %81 = vector.multi_reduction <add>, %80, %cst_31 [2] : vector<2x8x8xf32> to vector<2x8xf32>
    %82 = vector.shape_cast %81 : vector<2x8xf32> to vector<2x8x1xf32>
    %83 = tpu.reciprocal %82 {approx = true} : vector<2x8x1xf32> -> vector<2x8x1xf32>
    %84 = vector.broadcast %83 : vector<2x8x1xf32> to vector<2x8x8xf32>
    %85 = arith.mulf %80, %84 : vector<2x8x8xf32>
    %86 = vector.extract_strided_slice %15 {offsets = [0, 0, 24], sizes = [2, 8, 8], strides = [1, 1, 1]} : vector<2x8x32xf32> to vector<2x8x8xf32>
    "tpu.trace_start"() <{level = 10 : i32, message = "bqk,bkd->bqd"}> : () -> ()
    %cst_32 = arith.constant dense<0.000000e+00> : vector<2x8x8xf32>
    %87 = tpu.matmul %85, %86, %cst_32 {dimension_numbers = #tpu.dot_dimension_numbers<[2], [1], [1], [2], [0, 0, 0, 1, 1, 2], [0], [0]>} : vector<2x8x8xf32>, vector<2x8x8xf32>, vector<2x8x8xf32> -> vector<2x8x8xf32>
    "tpu.trace_stop"() : () -> ()
    %c0_33 = arith.constant 0 : index
    %c0_34 = arith.constant 0 : index
    %c24 = arith.constant 24 : index
    %88 = vector.load %arg16[%c0_33, %c0_34, %c24] : memref<2x8x32xf32, #tpu.memory_space<vmem>>, vector<2x8x8xf32>
    tpu.vector_store %arg16[%c0_33, %c0_34, %c24], %87 {strides = array<i32>} : memref<2x8x32xf32, #tpu.memory_space<vmem>>, vector<2x8x8xf32>,
    %c0_35 = arith.constant 0 : index
    %c0_36 = arith.constant 0 : index
    %c0_37 = arith.constant 0 : index
    %89 = vector.load %arg16[%c0_35, %c0_36, %c0_37] : memref<2x8x32xf32, #tpu.memory_space<vmem>>, vector<2x8x32xf32>
    %90 = vector.shape_cast %89 : vector<2x8x32xf32> to vector<16x32xf32>
    %91 = arith.truncf %90 : vector<16x32xf32> to vector<16x32xbf16>
    %c0_38 = arith.constant 0 : index
    %c0_39 = arith.constant 0 : index
    %92 = vector.load %arg5[%c0_38, %c0_39] : memref<32x32xbf16, #tpu.memory_space<vmem>>, vector<32x32xbf16>
    %cst_40 = arith.constant dense<0.000000e+00> : vector<16x32xf32>
    %93 = tpu.matmul %91, %92, %cst_40 {dimension_numbers = #tpu.dot_dimension_numbers<[1], [0], [0], [1], [0, 0, 1, 1], [], []>} : vector<16x32xbf16>, vector<32x32xbf16>, vector<16x32xf32> -> vector<16x32xf32>
    %c0_41 = arith.constant 0 : index
    %c0_42 = arith.constant 0 : index
    %94 = vector.load %arg6[%c0_41, %c0_42] : memref<1x32xf32, #tpu.memory_space<vmem>>, vector<1x32xf32>
    %95 = vector.broadcast %94 : vector<1x32xf32> to vector<16x32xf32>
    %96 = arith.addf %93, %95 : vector<16x32xf32>
    %c0_43 = arith.constant 0 : index
    %c0_44 = arith.constant 0 : index
    %97 = vector.load %arg7[%c0_43, %c0_44] : memref<1x32xf32, #tpu.memory_space<vmem>>, vector<1x32xf32>
    %c0_45 = arith.constant 0 : index
    %c0_46 = arith.constant 0 : index
    %98 = vector.load %arg8[%c0_45, %c0_46] : memref<1x32xf32, #tpu.memory_space<vmem>>, vector<1x32xf32>
    %cst_47 = arith.constant dense<0.000000e+00> : vector<16xf32>
    %99 = vector.multi_reduction <add>, %96, %cst_47 [1] : vector<16x32xf32> to vector<16xf32>
    %100 = vector.shape_cast %99 : vector<16xf32> to vector<16x1xf32>
    %cst_48 = arith.constant 3.200000e+01 : f32
    %101 = vector.broadcast %cst_48 : f32 to vector<16x1xf32>
    %102 = arith.divf %100, %101 : vector<16x1xf32>
    %103 = vector.broadcast %102 : vector<16x1xf32> to vector<16x32xf32>
    %104 = arith.subf %96, %103 : vector<16x32xf32>
    %105 = arith.mulf %104, %104 : vector<16x32xf32>
    %cst_49 = arith.constant dense<0.000000e+00> : vector<16xf32>
    %106 = vector.multi_reduction <add>, %105, %cst_49 [1] : vector<16x32xf32> to vector<16xf32>
    %107 = vector.shape_cast %106 : vector<16xf32> to vector<16x1xf32>
    %cst_50 = arith.constant 3.200000e+01 : f32
    %108 = vector.broadcast %cst_50 : f32 to vector<16x1xf32>
    %109 = arith.divf %107, %108 : vector<16x1xf32>
    %cst_51 = arith.constant 9.99999996E-13 : f32
    %110 = vector.broadcast %cst_51 : f32 to vector<16x1xf32>
    %111 = arith.addf %109, %110 : vector<16x1xf32>
    %112 = math.rsqrt %111 : vector<16x1xf32>
    %113 = vector.broadcast %112 : vector<16x1xf32> to vector<16x32xf32>
    %114 = arith.mulf %104, %113 : vector<16x32xf32>
    %115 = vector.broadcast %97 : vector<1x32xf32> to vector<16x32xf32>
    %116 = arith.mulf %114, %115 : vector<16x32xf32>
    %117 = vector.broadcast %98 : vector<1x32xf32> to vector<16x32xf32>
    %118 = arith.addf %116, %117 : vector<16x32xf32>
    %119 = arith.truncf %118 : vector<16x32xf32> to vector<16x32xbf16>
    %c0_52 = arith.constant 0 : index
    %c0_53 = arith.constant 0 : index
    %120 = vector.load %arg9[%c0_52, %c0_53] : memref<32x64xbf16, #tpu.memory_space<vmem>>, vector<32x64xbf16>
    %cst_54 = arith.constant dense<0.000000e+00> : vector<16x64xf32>
    %121 = tpu.matmul %119, %120, %cst_54 {dimension_numbers = #tpu.dot_dimension_numbers<[1], [0], [0], [1], [0, 0, 1, 1], [], []>} : vector<16x32xbf16>, vector<32x64xbf16>, vector<16x64xf32> -> vector<16x64xf32>
    %c0_55 = arith.constant 0 : index
    %c0_56 = arith.constant 0 : index
    %122 = vector.load %arg10[%c0_55, %c0_56] : memref<1x64xf32, #tpu.memory_space<vmem>>, vector<1x64xf32>
    %123 = vector.broadcast %122 : vector<1x64xf32> to vector<16x64xf32>
    %124 = arith.addf %121, %123 : vector<16x64xf32>
    %cst_57 = arith.constant 0.000000e+00 : f32
    %125 = vector.broadcast %cst_57 : f32 to vector<16x64xf32>
    %126 = arith.maximumf %124, %125 : vector<16x64xf32>
    %127 = arith.truncf %126 : vector<16x64xf32> to vector<16x64xbf16>
    %c0_58 = arith.constant 0 : index
    %c0_59 = arith.constant 0 : index
    %128 = vector.load %arg11[%c0_58, %c0_59] : memref<64x32xbf16, #tpu.memory_space<vmem>>, vector<64x32xbf16>
    %cst_60 = arith.constant dense<0.000000e+00> : vector<16x32xf32>
    %129 = tpu.matmul %127, %128, %cst_60 {dimension_numbers = #tpu.dot_dimension_numbers<[1], [0], [0], [1], [0, 0, 1, 1], [], []>} : vector<16x64xbf16>, vector<64x32xbf16>, vector<16x32xf32> -> vector<16x32xf32>
    %c0_61 = arith.constant 0 : index
    %c0_62 = arith.constant 0 : index
    %130 = vector.load %arg12[%c0_61, %c0_62] : memref<1x32xf32, #tpu.memory_space<vmem>>, vector<1x32xf32>
    %131 = vector.broadcast %130 : vector<1x32xf32> to vector<16x32xf32>
    %132 = arith.addf %129, %131 : vector<16x32xf32>
    %c0_63 = arith.constant 0 : index
    %c0_64 = arith.constant 0 : index
    %133 = vector.load %arg13[%c0_63, %c0_64] : memref<1x32xf32, #tpu.memory_space<vmem>>, vector<1x32xf32>
    %c0_65 = arith.constant 0 : index
    %c0_66 = arith.constant 0 : index
    %134 = vector.load %arg14[%c0_65, %c0_66] : memref<1x32xf32, #tpu.memory_space<vmem>>, vector<1x32xf32>
    %cst_67 = arith.constant dense<0.000000e+00> : vector<16xf32>
    %135 = vector.multi_reduction <add>, %132, %cst_67 [1] : vector<16x32xf32> to vector<16xf32>
    %136 = vector.shape_cast %135 : vector<16xf32> to vector<16x1xf32>
    %cst_68 = arith.constant 3.200000e+01 : f32
    %137 = vector.broadcast %cst_68 : f32 to vector<16x1xf32>
    %138 = arith.divf %136, %137 : vector<16x1xf32>
    %139 = vector.broadcast %138 : vector<16x1xf32> to vector<16x32xf32>
    %140 = arith.subf %132, %139 : vector<16x32xf32>
    %141 = arith.mulf %140, %140 : vector<16x32xf32>
    %cst_69 = arith.constant dense<0.000000e+00> : vector<16xf32>
    %142 = vector.multi_reduction <add>, %141, %cst_69 [1] : vector<16x32xf32> to vector<16xf32>
    %143 = vector.shape_cast %142 : vector<16xf32> to vector<16x1xf32>
    %cst_70 = arith.constant 3.200000e+01 : f32
    %144 = vector.broadcast %cst_70 : f32 to vector<16x1xf32>
    %145 = arith.divf %143, %144 : vector<16x1xf32>
    %cst_71 = arith.constant 9.99999996E-13 : f32
    %146 = vector.broadcast %cst_71 : f32 to vector<16x1xf32>
    %147 = arith.addf %145, %146 : vector<16x1xf32>
    %148 = math.rsqrt %147 : vector<16x1xf32>
    %149 = vector.broadcast %148 : vector<16x1xf32> to vector<16x32xf32>
    %150 = arith.mulf %140, %149 : vector<16x32xf32>
    %151 = vector.broadcast %133 : vector<1x32xf32> to vector<16x32xf32>
    %152 = arith.mulf %150, %151 : vector<16x32xf32>
    %153 = vector.broadcast %134 : vector<1x32xf32> to vector<16x32xf32>
    %154 = arith.addf %152, %153 : vector<16x32xf32>
    %155 = vector.shape_cast %154 : vector<16x32xf32> to vector<2x8x32xf32>
    %c0_72 = arith.constant 0 : index
    %c0_73 = arith.constant 0 : index
    %c0_74 = arith.constant 0 : index
    %156 = vector.load %arg15[%c0_72, %c0_73, %c0_74] : memref<2x8x32xf32, #tpu.memory_space<vmem>>, vector<2x8x32xf32>
    tpu.vector_store %arg15[%c0_72, %c0_73, %c0_74], %155 {strides = array<i32>} : memref<2x8x32xf32, #tpu.memory_space<vmem>>, vector<2x8x32xf32>,
    return
  }
  func.func @transform_0(%arg0: i32) -> (i32, i32, i32) {
    %c0_i32 = arith.constant 0 : i32
    %c0_i32_0 = arith.constant 0 : i32
    %c0_i32_1 = arith.constant 0 : i32
    return %arg0, %c0_i32, %c0_i32_0 : i32, i32, i32
  }
  func.func @transform_1(%arg0: i32) -> (i32, i32, i32) {
    %c0_i32 = arith.constant 0 : i32
    %c0_i32_0 = arith.constant 0 : i32
    %c0_i32_1 = arith.constant 0 : i32
    return %arg0, %c0_i32, %c0_i32_0 : i32, i32, i32
  }
  func.func @transform_2(%arg0: i32) -> (i32, i32) {
    %c0_i32 = arith.constant 0 : i32
    %c0_i32_0 = arith.constant 0 : i32
    %c0_i32_1 = arith.constant 0 : i32
    return %c0_i32, %c0_i32_0 : i32, i32
  }
  func.func @transform_3(%arg0: i32) -> (i32, i32) {
    %c0_i32 = arith.constant 0 : i32
    %c0_i32_0 = arith.constant 0 : i32
    %c0_i32_1 = arith.constant 0 : i32
    return %c0_i32, %c0_i32_0 : i32, i32
  }
  func.func @transform_4(%arg0: i32) -> (i32, i32) {
    %c0_i32 = arith.constant 0 : i32
    %c0_i32_0 = arith.constant 0 : i32
    %c0_i32_1 = arith.constant 0 : i32
    return %c0_i32, %c0_i32_0 : i32, i32
  }
  func.func @transform_5(%arg0: i32) -> (i32, i32) {
    %c0_i32 = arith.constant 0 : i32
    %c0_i32_0 = arith.constant 0 : i32
    %c0_i32_1 = arith.constant 0 : i32
    return %c0_i32, %c0_i32_0 : i32, i32
  }
  func.func @transform_6(%arg0: i32) -> (i32, i32) {
    %c0_i32 = arith.constant 0 : i32
    %c0_i32_0 = arith.constant 0 : i32
    %c0_i32_1 = arith.constant 0 : i32
    return %c0_i32, %c0_i32_0 : i32, i32
  }
  func.func @transform_7(%arg0: i32) -> (i32, i32) {
    %c0_i32 = arith.constant 0 : i32
    %c0_i32_0 = arith.constant 0 : i32
    %c0_i32_1 = arith.constant 0 : i32
    return %c0_i32, %c0_i32_0 : i32, i32
  }
  func.func @transform_8(%arg0: i32) -> (i32, i32) {
    %c0_i32 = arith.constant 0 : i32
    %c0_i32_0 = arith.constant 0 : i32
    %c0_i32_1 = arith.constant 0 : i32
    return %c0_i32, %c0_i32_0 : i32, i32
  }
  func.func @transform_9(%arg0: i32) -> (i32, i32) {
    %c0_i32 = arith.constant 0 : i32
    %c0_i32_0 = arith.constant 0 : i32
    %c0_i32_1 = arith.constant 0 : i32
    return %c0_i32, %c0_i32_0 : i32, i32
  }
  func.func @transform_10(%arg0: i32) -> (i32, i32) {
    %c0_i32 = arith.constant 0 : i32
    %c0_i32_0 = arith.constant 0 : i32
    %c0_i32_1 = arith.constant 0 : i32
    return %c0_i32, %c0_i32_0 : i32, i32
  }
  func.func @transform_11(%arg0: i32) -> (i32, i32) {
    %c0_i32 = arith.constant 0 : i32
    %c0_i32_0 = arith.constant 0 : i32
    %c0_i32_1 = arith.constant 0 : i32
    return %c0_i32, %c0_i32_0 : i32, i32
  }
  func.func @transform_12(%arg0: i32) -> (i32, i32) {
    %c0_i32 = arith.constant 0 : i32
    %c0_i32_0 = arith.constant 0 : i32
    %c0_i32_1 = arith.constant 0 : i32
    return %c0_i32, %c0_i32_0 : i32, i32
  }
  func.func @transform_13(%arg0: i32) -> (i32, i32) {
    %c0_i32 = arith.constant 0 : i32
    %c0_i32_0 = arith.constant 0 : i32
    %c0_i32_1 = arith.constant 0 : i32
    return %c0_i32, %c0_i32_0 : i32, i32
  }
  func.func @transform_14(%arg0: i32) -> (i32, i32, i32) {
    %c0_i32 = arith.constant 0 : i32
    %c0_i32_0 = arith.constant 0 : i32
    %c0_i32_1 = arith.constant 0 : i32
    return %arg0, %c0_i32, %c0_i32_0 : i32, i32, i32
  }
}

module attributes {stable_mosaic.version = 11 : i64} {
  func.func @_encoder_kernel(%arg0: i32, %arg1: memref<2x8x32xf32, #tpu.memory_space<vmem>>, %arg2: memref<2x1x8xf32, #tpu.memory_space<vmem>>, %arg3: memref<32x96xbf16, #tpu.memory_space<vmem>>, %arg4: memref<1x96xf32, #tpu.memory_space<vmem>>, %arg5: memref<32x32xbf16, #tpu.memory_space<vmem>>, %arg6: memref<1x32xf32, #tpu.memory_space<vmem>>, %arg7: memref<1x32xf32, #tpu.memory_space<vmem>>, %arg8: memref<1x32xf32, #tpu.memory_space<vmem>>, %arg9: memref<32x64xbf16, #tpu.memory_space<vmem>>, %arg10: memref<1x64xf32, #tpu.memory_space<vmem>>, %arg11: memref<64x32xbf16, #tpu.memory_space<vmem>>, %arg12: memref<1x32xf32, #tpu.memory_space<vmem>>, %arg13: memref<1x32xf32, #tpu.memory_space<vmem>>, %arg14: memref<1x32xf32, #tpu.memory_space<vmem>>, %arg15: memref<2x8x32xf32, #tpu.memory_space<vmem>>, %arg16: memref<2x8x32xf32, #tpu.memory_space<vmem>>) attributes {dimension_semantics = [#tpu.dimension_semantics<parallel>], iteration_bounds = array<i64: 1>, scalar_prefetch = 0 : i64, scratch_operands = 1 : i64, tpu.core_type = #tpu.core_type<tc>, window_params = [{transform_indices = @transform_0, window_bounds = array<i64: 2, 8, 32>}, {transform_indices = @transform_1, window_bounds = array<i64: 2, 1, 8>}, {pipeline_mode = #tpu.pipeline_mode<synchronous>, transform_indices = @transform_2, window_bounds = array<i64: 32, 96>}, {pipeline_mode = #tpu.pipeline_mode<synchronous>, transform_indices = @transform_3, window_bounds = array<i64: 1, 96>}, {pipeline_mode = #tpu.pipeline_mode<synchronous>, transform_indices = @transform_4, window_bounds = array<i64: 32, 32>}, {pipeline_mode = #tpu.pipeline_mode<synchronous>, transform_indices = @transform_5, window_bounds = array<i64: 1, 32>}, {pipeline_mode = #tpu.pipeline_mode<synchronous>, transform_indices = @transform_6, window_bounds = array<i64: 1, 32>}, {pipeline_mode = #tpu.pipeline_mode<synchronous>, transform_indices = @transform_7, window_bounds = array<i64: 1, 32>}, {pipeline_mode = #tpu.pipeline_mode<synchronous>, transform_indices = @transform_8, window_bounds = array<i64: 32, 64>}, {pipeline_mode = #tpu.pipeline_mode<synchronous>, transform_indices = @transform_9, window_bounds = array<i64: 1, 64>}, {pipeline_mode = #tpu.pipeline_mode<synchronous>, transform_indices = @transform_10, window_bounds = array<i64: 64, 32>}, {pipeline_mode = #tpu.pipeline_mode<synchronous>, transform_indices = @transform_11, window_bounds = array<i64: 1, 32>}, {pipeline_mode = #tpu.pipeline_mode<synchronous>, transform_indices = @transform_12, window_bounds = array<i64: 1, 32>}, {pipeline_mode = #tpu.pipeline_mode<synchronous>, transform_indices = @transform_13, window_bounds = array<i64: 1, 32>}, {transform_indices = @transform_14, window_bounds = array<i64: 2, 8, 32>}]} {
    %c0 = arith.constant 0 : index
    %c0_0 = arith.constant 0 : index
    %c0_1 = arith.constant 0 : index
    %0 = vector.load %arg1[%c0, %c0_0, %c0_1] : memref<2x8x32xf32, #tpu.memory_space<vmem>>, vector<2x8x32xf32>
    %1 = vector.shape_cast %0 : vector<2x8x32xf32> to vector<16x32xf32>
    %2 = arith.truncf %1 : vector<16x32xf32> to vector<16x32xbf16>
    %c0_2 = arith.constant 0 : index
    %c0_3 = arith.constant 0 : index
    %3 = vector.load %arg3[%c0_2, %c0_3] : memref<32x96xbf16, #tpu.memory_space<vmem>>, vector<32x96xbf16>
    %cst = arith.constant dense<0.000000e+00> : vector<16x96xf32>
    %4 = tpu.matmul %2, %3, %cst {dimension_numbers = #tpu.dot_dimension_numbers<[1], [0], [0], [1], [0, 0, 1, 1], [], []>} : vector<16x32xbf16>, vector<32x96xbf16>, vector<16x96xf32> -> vector<16x96xf32>
    %c0_4 = arith.constant 0 : index
    %c0_5 = arith.constant 0 : index
    %5 = vector.load %arg4[%c0_4, %c0_5] : memref<1x96xf32, #tpu.memory_space<vmem>>, vector<1x96xf32>
    %6 = vector.broadcast %5 : vector<1x96xf32> to vector<16x96xf32>
    %7 = arith.addf %4, %6 : vector<16x96xf32>
    %8 = vector.extract_strided_slice %7 {offsets = [0, 0], sizes = [16, 32], strides = [1, 1]} : vector<16x96xf32> to vector<16x32xf32>
    %cst_6 = arith.constant 0.353553385 : f32
    %9 = vector.broadcast %cst_6 : f32 to vector<16x32xf32>
    %10 = arith.mulf %8, %9 : vector<16x32xf32>
    %11 = vector.shape_cast %10 : vector<16x32xf32> to vector<2x8x32xf32>
    %12 = vector.extract_strided_slice %7 {offsets = [0, 32], sizes = [16, 32], strides = [1, 1]} : vector<16x96xf32> to vector<16x32xf32>
    %13 = vector.shape_cast %12 : vector<16x32xf32> to vector<2x8x32xf32>
    %14 = vector.extract_strided_slice %7 {offsets = [0, 64], sizes = [16, 32], strides = [1, 1]} : vector<16x96xf32> to vector<16x32xf32>
    %15 = vector.shape_cast %14 : vector<16x32xf32> to vector<2x8x32xf32>
    %c0_7 = arith.constant 0 : index
    %c0_8 = arith.constant 0 : index
    %c0_9 = arith.constant 0 : index
    %16 = vector.load %arg2[%c0_7, %c0_8, %c0_9] : memref<2x1x8xf32, #tpu.memory_space<vmem>>, vector<2x1x8xf32>
    %17 = vector.extract_strided_slice %11 {offsets = [0, 0, 0], sizes = [2, 8, 8], strides = [1, 1, 1]} : vector<2x8x32xf32> to vector<2x8x8xf32>
    %18 = vector.extract_strided_slice %13 {offsets = [0, 0, 0], sizes = [2, 8, 8], strides = [1, 1, 1]} : vector<2x8x32xf32> to vector<2x8x8xf32>
    "tpu.trace_start"() <{level = 10 : i32, message = "bqd,bkd->bqk"}> : () -> ()
    %cst_10 = arith.constant dense<0.000000e+00> : vector<2x8x8xf32>
    %19 = tpu.matmul %17, %18, %cst_10 {dimension_numbers = #tpu.dot_dimension_numbers<[2], [2], [1], [1], [0, 0, 0, 1, 1, 1], [0], [0]>} : vector<2x8x8xf32>, vector<2x8x8xf32>, vector<2x8x8xf32> -> vector<2x8x8xf32>
    "tpu.trace_stop"() : () -> ()
    %20 = vector.broadcast %16 : vector<2x1x8xf32> to vector<2x8x8xf32>
    %21 = arith.addf %19, %20 : vector<2x8x8xf32>
    %cst_11 = arith.constant dense<0xFF800000> : vector<2x8xf32>
    %22 = vector.multi_reduction <maximumf>, %21, %cst_11 [2] : vector<2x8x8xf32> to vector<2x8xf32>
    %23 = vector.shape_cast %22 : vector<2x8xf32> to vector<2x8x1xf32>
    %24 = vector.broadcast %23 : vector<2x8x1xf32> to vector<2x8x8xf32>
    %25 = arith.subf %21, %24 : vector<2x8x8xf32>
    %26 = math.exp %25 : vector<2x8x8xf32>
    %cst_12 = arith.constant dense<0.000000e+00> : vector<2x8xf32>
    %27 = vector.multi_reduction <add>, %26, %cst_12 [2] : vector<2x8x8xf32> to vector<2x8xf32>
    %28 = vector.shape_cast %27 : vector<2x8xf32> to vector<2x8x1xf32>
    %29 = tpu.reciprocal %28 {approx = true} : vector<2x8x1xf32> -> vector<2x8x1xf32>
    %30 = vector.broadcast %29 : vector<2x8x1xf32> to vector<2x8x8xf32>
    %31 = arith.mulf %26, %30 : vector<2x8x8xf32>
    %32 = vector.extract_strided_slice %15 {offsets = [0, 0, 0], sizes = [2, 8, 8], strides = [1, 1, 1]} : vector<2x8x32xf32> to vector<2x8x8xf32>
    "tpu.trace_start"() <{level = 10 : i32, message = "bqk,bkd->bqd"}> : () -> ()
    %cst_13 = arith.constant dense<0.000000e+00> : vector<2x8x8xf32>
    %33 = tpu.matmul %31, %32, %cst_13 {dimension_numbers = #tpu.dot_dimension_numbers<[2], [1], [1], [2], [0, 0, 0, 1, 1, 2], [0], [0]>} : vector<2x8x8xf32>, vector<2x8x8xf32>, vector<2x8x8xf32> -> vector<2x8x8xf32>
    "tpu.trace_stop"() : () -> ()
    %c0_14 = arith.constant 0 : index
    %c0_15 = arith.constant 0 : index
    %c0_16 = arith.constant 0 : index
    %34 = vector.load %arg16[%c0_14, %c0_15, %c0_16] : memref<2x8x32xf32, #tpu.memory_space<vmem>>, vector<2x8x8xf32>
    tpu.vector_store %arg16[%c0_14, %c0_15, %c0_16], %33 {strides = array<i32>} : memref<2x8x32xf32, #tpu.memory_space<vmem>>, vector<2x8x8xf32>,
    %35 = vector.extract_strided_slice %11 {offsets = [0, 0, 8], sizes = [2, 8, 8], strides = [1, 1, 1]} : vector<2x8x32xf32> to vector<2x8x8xf32>
    %36 = vector.extract_strided_slice %13 {offsets = [0, 0, 8], sizes = [2, 8, 8], strides = [1, 1, 1]} : vector<2x8x32xf32> to vector<2x8x8xf32>
    "tpu.trace_start"() <{level = 10 : i32, message = "bqd,bkd->bqk"}> : () -> ()
    %cst_17 = arith.constant dense<0.000000e+00> : vector<2x8x8xf32>
    %37 = tpu.matmul %35, %36, %cst_17 {dimension_numbers = #tpu.dot_dimension_numbers<[2], [2], [1], [1], [0, 0, 0, 1, 1, 1], [0], [0]>} : vector<2x8x8xf32>, vector<2x8x8xf32>, vector<2x8x8xf32> -> vector<2x8x8xf32>
    "tpu.trace_stop"() : () -> ()
    %38 = vector.broadcast %16 : vector<2x1x8xf32> to vector<2x8x8xf32>
    %39 = arith.addf %37, %38 : vector<2x8x8xf32>
    %cst_18 = arith.constant dense<0xFF800000> : vector<2x8xf32>
    %40 = vector.multi_reduction <maximumf>, %39, %cst_18 [2] : vector<2x8x8xf32> to vector<2x8xf32>
    %41 = vector.shape_cast %40 : vector<2x8xf32> to vector<2x8x1xf32>
    %42 = vector.broadcast %41 : vector<2x8x1xf32> to vector<2x8x8xf32>
    %43 = arith.subf %39, %42 : vector<2x8x8xf32>
    %44 = math.exp %43 : vector<2x8x8xf32>
    %cst_19 = arith.constant dense<0.000000e+00> : vector<2x8xf32>
    %45 = vector.multi_reduction <add>, %44, %cst_19 [2] : vector<2x8x8xf32> to vector<2x8xf32>
    %46 = vector.shape_cast %45 : vector<2x8xf32> to vector<2x8x1xf32>
    %47 = tpu.reciprocal %46 {approx = true} : vector<2x8x1xf32> -> vector<2x8x1xf32>
    %48 = vector.broadcast %47 : vector<2x8x1xf32> to vector<2x8x8xf32>
    %49 = arith.mulf %44, %48 : vector<2x8x8xf32>
    %50 = vector.extract_strided_slice %15 {offsets = [0, 0, 8], sizes = [2, 8, 8], strides = [1, 1, 1]} : vector<2x8x32xf32> to vector<2x8x8xf32>
    "tpu.trace_start"() <{level = 10 : i32, message = "bqk,bkd->bqd"}> : () -> ()
    %cst_20 = arith.constant dense<0.000000e+00> : vector<2x8x8xf32>
    %51 = tpu.matmul %49, %50, %cst_20 {dimension_numbers = #tpu.dot_dimension_numbers<[2], [1], [1], [2], [0, 0, 0, 1, 1, 2], [0], [0]>} : vector<2x8x8xf32>, vector<2x8x8xf32>, vector<2x8x8xf32> -> vector<2x8x8xf32>
    "tpu.trace_stop"() : () -> ()
    %c0_21 = arith.constant 0 : index
    %c0_22 = arith.constant 0 : index
    %c8 = arith.constant 8 : index
    %52 = vector.load %arg16[%c0_21, %c0_22, %c8] : memref<2x8x32xf32, #tpu.memory_space<vmem>>, vector<2x8x8xf32>
    tpu.vector_store %arg16[%c0_21, %c0_22, %c8], %51 {strides = array<i32>} : memref<2x8x32xf32, #tpu.memory_space<vmem>>, vector<2x8x8xf32>,
    %53 = vector.extract_strided_slice %11 {offsets = [0, 0, 16], sizes = [2, 8, 8], strides = [1, 1, 1]} : vector<2x8x32xf32> to vector<2x8x8xf32>
    %54 = vector.extract_strided_slice %13 {offsets = [0, 0, 16], sizes = [2, 8, 8], strides = [1, 1, 1]} : vector<2x8x32xf32> to vector<2x8x8xf32>
    "tpu.trace_start"() <{level = 10 : i32, message = "bqd,bkd->bqk"}> : () -> ()
    %cst_23 = arith.constant dense<0.000000e+00> : vector<2x8x8xf32>
    %55 = tpu.matmul %53, %54, %cst_23 {dimension_numbers = #tpu.dot_dimension_numbers<[2], [2], [1], [1], [0, 0, 0, 1, 1, 1], [0], [0]>} : vector<2x8x8xf32>, vector<2x8x8xf32>, vector<2x8x8xf32> -> vector<2x8x8xf32>
    "tpu.trace_stop"() : () -> ()
    %56 = vector.broadcast %16 : vector<2x1x8xf32> to vector<2x8x8xf32>
    %57 = arith.addf %55, %56 : vector<2x8x8xf32>
    %cst_24 = arith.constant dense<0xFF800000> : vector<2x8xf32>
    %58 = vector.multi_reduction <maximumf>, %57, %cst_24 [2] : vector<2x8x8xf32> to vector<2x8xf32>
    %59 = vector.shape_cast %58 : vector<2x8xf32> to vector<2x8x1xf32>
    %60 = vector.broadcast %59 : vector<2x8x1xf32> to vector<2x8x8xf32>
    %61 = arith.subf %57, %60 : vector<2x8x8xf32>
    %62 = math.exp %61 : vector<2x8x8xf32>
    %cst_25 = arith.constant dense<0.000000e+00> : vector<2x8xf32>
    %63 = vector.multi_reduction <add>, %62, %cst_25 [2] : vector<2x8x8xf32> to vector<2x8xf32>
    %64 = vector.shape_cast %63 : vector<2x8xf32> to vector<2x8x1xf32>
    %65 = tpu.reciprocal %64 {approx = true} : vector<2x8x1xf32> -> vector<2x8x1xf32>
    %66 = vector.broadcast %65 : vector<2x8x1xf32> to vector<2x8x8xf32>
    %67 = arith.mulf %62, %66 : vector<2x8x8xf32>
    %68 = vector.extract_strided_slice %15 {offsets = [0, 0, 16], sizes = [2, 8, 8], strides = [1, 1, 1]} : vector<2x8x32xf32> to vector<2x8x8xf32>
    "tpu.trace_start"() <{level = 10 : i32, message = "bqk,bkd->bqd"}> : () -> ()
    %cst_26 = arith.constant dense<0.000000e+00> : vector<2x8x8xf32>
    %69 = tpu.matmul %67, %68, %cst_26 {dimension_numbers = #tpu.dot_dimension_numbers<[2], [1], [1], [2], [0, 0, 0, 1, 1, 2], [0], [0]>} : vector<2x8x8xf32>, vector<2x8x8xf32>, vector<2x8x8xf32> -> vector<2x8x8xf32>
    "tpu.trace_stop"() : () -> ()
    %c0_27 = arith.constant 0 : index
    %c0_28 = arith.constant 0 : index
    %c16 = arith.constant 16 : index
    %70 = vector.load %arg16[%c0_27, %c0_28, %c16] : memref<2x8x32xf32, #tpu.memory_space<vmem>>, vector<2x8x8xf32>
    tpu.vector_store %arg16[%c0_27, %c0_28, %c16], %69 {strides = array<i32>} : memref<2x8x32xf32, #tpu.memory_space<vmem>>, vector<2x8x8xf32>,
    %71 = vector.extract_strided_slice %11 {offsets = [0, 0, 24], sizes = [2, 8, 8], strides = [1, 1, 1]} : vector<2x8x32xf32> to vector<2x8x8xf32>
    %72 = vector.extract_strided_slice %13 {offsets = [0, 0, 24], sizes = [2, 8, 8], strides = [1, 1, 1]} : vector<2x8x32xf32> to vector<2x8x8xf32>
    "tpu.trace_start"() <{level = 10 : i32, message = "bqd,bkd->bqk"}> : () -> ()
    %cst_29 = arith.constant dense<0.000000e+00> : vector<2x8x8xf32>
    %73 = tpu.matmul %71, %72, %cst_29 {dimension_numbers = #tpu.dot_dimension_numbers<[2], [2], [1], [1], [0, 0, 0, 1, 1, 1], [0], [0]>} : vector<2x8x8xf32>, vector<2x8x8xf32>, vector<2x8x8xf32> -> vector<2x8x8xf32>
    "tpu.trace_stop"() : () -> ()
    %74 = vector.broadcast %16 : vector<2x1x8xf32> to vector<2x8x8xf32>
    %75 = arith.addf %73, %74 : vector<2x8x8xf32>
    %cst_30 = arith.constant dense<0xFF800000> : vector<2x8xf32>
    %76 = vector.multi_reduction <maximumf>, %75, %cst_30 [2] : vector<2x8x8xf32> to vector<2x8xf32>
    %77 = vector.shape_cast %76 : vector<2x8xf32> to vector<2x8x1xf32>
    %78 = vector.broadcast %77 : vector<2x8x1xf32> to vector<2x8x8xf32>
    %79 = arith.subf %75, %78 : vector<2x8x8xf32>
    %80 = math.exp %79 : vector<2x8x8xf32>
    %cst_31 = arith.constant dense<0.000000e+00> : vector<2x8xf32>
    %81 = vector.multi_reduction <add>, %80, %cst_31 [2] : vector<2x8x8xf32> to vector<2x8xf32>
    %82 = vector.shape_cast %81 : vector<2x8xf32> to vector<2x8x1xf32>
    %83 = tpu.reciprocal %82 {approx = true} : vector<2x8x1xf32> -> vector<2x8x1xf32>
    %84 = vector.broadcast %83 : vector<2x8x1xf32> to vector<2x8x8xf32>
    %85 = arith.mulf %80, %84 : vector<2x8x8xf32>
    %86 = vector.extract_strided_slice %15 {offsets = [0, 0, 24], sizes = [2, 8, 8], strides = [1, 1, 1]} : vector<2x8x32xf32> to vector<2x8x8xf32>
    "tpu.trace_start"() <{level = 10 : i32, message = "bqk,bkd->bqd"}> : () -> ()
    %cst_32 = arith.constant dense<0.000000e+00> : vector<2x8x8xf32>
    %87 = tpu.matmul %85, %86, %cst_32 {dimension_numbers = #tpu.dot_dimension_numbers<[2], [1], [1], [2], [0, 0, 0, 1, 1, 2], [0], [0]>} : vector<2x8x8xf32>, vector<2x8x8xf32>, vector<2x8x8xf32> -> vector<2x8x8xf32>
    "tpu.trace_stop"() : () -> ()
    %c0_33 = arith.constant 0 : index
    %c0_34 = arith.constant 0 : index
    %c24 = arith.constant 24 : index
    %88 = vector.load %arg16[%c0_33, %c0_34, %c24] : memref<2x8x32xf32, #tpu.memory_space<vmem>>, vector<2x8x8xf32>
    tpu.vector_store %arg16[%c0_33, %c0_34, %c24], %87 {strides = array<i32>} : memref<2x8x32xf32, #tpu.memory_space<vmem>>, vector<2x8x8xf32>,
    %c0_35 = arith.constant 0 : index
    %c0_36 = arith.constant 0 : index
    %c0_37 = arith.constant 0 : index
    %89 = vector.load %arg16[%c0_35, %c0_36, %c0_37] : memref<2x8x32xf32, #tpu.memory_space<vmem>>, vector<2x8x32xf32>
    %90 = vector.shape_cast %89 : vector<2x8x32xf32> to vector<16x32xf32>
    %91 = arith.truncf %90 : vector<16x32xf32> to vector<16x32xbf16>
    %c0_38 = arith.constant 0 : index
    %c0_39 = arith.constant 0 : index
    %92 = vector.load %arg5[%c0_38, %c0_39] : memref<32x32xbf16, #tpu.memory_space<vmem>>, vector<32x32xbf16>
    %cst_40 = arith.constant dense<0.000000e+00> : vector<16x32xf32>
    %93 = tpu.matmul %91, %92, %cst_40 {dimension_numbers = #tpu.dot_dimension_numbers<[1], [0], [0], [1], [0, 0, 1, 1], [], []>} : vector<16x32xbf16>, vector<32x32xbf16>, vector<16x32xf32> -> vector<16x32xf32>
    %c0_41 = arith.constant 0 : index
    %c0_42 = arith.constant 0 : index
    %94 = vector.load %arg6[%c0_41, %c0_42] : memref<1x32xf32, #tpu.memory_space<vmem>>, vector<1x32xf32>
    %95 = vector.broadcast %94 : vector<1x32xf32> to vector<16x32xf32>
    %96 = arith.addf %93, %95 : vector<16x32xf32>
    %c0_43 = arith.constant 0 : index
    %c0_44 = arith.constant 0 : index
    %97 = vector.load %arg7[%c0_43, %c0_44] : memref<1x32xf32, #tpu.memory_space<vmem>>, vector<1x32xf32>
    %c0_45 = arith.constant 0 : index
    %c0_46 = arith.constant 0 : index
    %98 = vector.load %arg8[%c0_45, %c0_46] : memref<1x32xf32, #tpu.memory_space<vmem>>, vector<1x32xf32>
    %cst_47 = arith.constant dense<0.000000e+00> : vector<16xf32>
    %99 = vector.multi_reduction <add>, %96, %cst_47 [1] : vector<16x32xf32> to vector<16xf32>
    %100 = vector.shape_cast %99 : vector<16xf32> to vector<16x1xf32>
    %cst_48 = arith.constant 3.200000e+01 : f32
    %101 = vector.broadcast %cst_48 : f32 to vector<16x1xf32>
    %102 = arith.divf %100, %101 : vector<16x1xf32>
    %103 = vector.broadcast %102 : vector<16x1xf32> to vector<16x32xf32>
    %104 = arith.subf %96, %103 : vector<16x32xf32>
    %105 = arith.mulf %104, %104 : vector<16x32xf32>
    %cst_49 = arith.constant dense<0.000000e+00> : vector<16xf32>
    %106 = vector.multi_reduction <add>, %105, %cst_49 [1] : vector<16x32xf32> to vector<16xf32>
    %107 = vector.shape_cast %106 : vector<16xf32> to vector<16x1xf32>
    %cst_50 = arith.constant 3.200000e+01 : f32
    %108 = vector.broadcast %cst_50 : f32 to vector<16x1xf32>
    %109 = arith.divf %107, %108 : vector<16x1xf32>
    %cst_51 = arith.constant 9.99999996E-13 : f32
    %110 = vector.broadcast %cst_51 : f32 to vector<16x1xf32>
    %111 = arith.addf %109, %110 : vector<16x1xf32>
    %112 = math.rsqrt %111 : vector<16x1xf32>
    %113 = vector.broadcast %112 : vector<16x1xf32> to vector<16x32xf32>
    %114 = arith.mulf %104, %113 : vector<16x32xf32>
    %115 = vector.broadcast %97 : vector<1x32xf32> to vector<16x32xf32>
    %116 = arith.mulf %114, %115 : vector<16x32xf32>
    %117 = vector.broadcast %98 : vector<1x32xf32> to vector<16x32xf32>
    %118 = arith.addf %116, %117 : vector<16x32xf32>
    %119 = arith.truncf %118 : vector<16x32xf32> to vector<16x32xbf16>
    %c0_52 = arith.constant 0 : index
    %c0_53 = arith.constant 0 : index
    %120 = vector.load %arg9[%c0_52, %c0_53] : memref<32x64xbf16, #tpu.memory_space<vmem>>, vector<32x64xbf16>
    %cst_54 = arith.constant dense<0.000000e+00> : vector<16x64xf32>
    %121 = tpu.matmul %119, %120, %cst_54 {dimension_numbers = #tpu.dot_dimension_numbers<[1], [0], [0], [1], [0, 0, 1, 1], [], []>} : vector<16x32xbf16>, vector<32x64xbf16>, vector<16x64xf32> -> vector<16x64xf32>
    %c0_55 = arith.constant 0 : index
    %c0_56 = arith.constant 0 : index
    %122 = vector.load %arg10[%c0_55, %c0_56] : memref<1x64xf32, #tpu.memory_space<vmem>>, vector<1x64xf32>
    %123 = vector.broadcast %122 : vector<1x64xf32> to vector<16x64xf32>
    %124 = arith.addf %121, %123 : vector<16x64xf32>
    %cst_57 = arith.constant 0.000000e+00 : f32
    %125 = vector.broadcast %cst_57 : f32 to vector<16x64xf32>
    %126 = arith.maximumf %124, %125 : vector<16x64xf32>
    %127 = arith.truncf %126 : vector<16x64xf32> to vector<16x64xbf16>
    %c0_58 = arith.constant 0 : index
    %c0_59 = arith.constant 0 : index
    %128 = vector.load %arg11[%c0_58, %c0_59] : memref<64x32xbf16, #tpu.memory_space<vmem>>, vector<64x32xbf16>
    %cst_60 = arith.constant dense<0.000000e+00> : vector<16x32xf32>
    %129 = tpu.matmul %127, %128, %cst_60 {dimension_numbers = #tpu.dot_dimension_numbers<[1], [0], [0], [1], [0, 0, 1, 1], [], []>} : vector<16x64xbf16>, vector<64x32xbf16>, vector<16x32xf32> -> vector<16x32xf32>
    %c0_61 = arith.constant 0 : index
    %c0_62 = arith.constant 0 : index
    %130 = vector.load %arg12[%c0_61, %c0_62] : memref<1x32xf32, #tpu.memory_space<vmem>>, vector<1x32xf32>
    %131 = vector.broadcast %130 : vector<1x32xf32> to vector<16x32xf32>
    %132 = arith.addf %129, %131 : vector<16x32xf32>
    %c0_63 = arith.constant 0 : index
    %c0_64 = arith.constant 0 : index
    %133 = vector.load %arg13[%c0_63, %c0_64] : memref<1x32xf32, #tpu.memory_space<vmem>>, vector<1x32xf32>
    %c0_65 = arith.constant 0 : index
    %c0_66 = arith.constant 0 : index
    %134 = vector.load %arg14[%c0_65, %c0_66] : memref<1x32xf32, #tpu.memory_space<vmem>>, vector<1x32xf32>
    %cst_67 = arith.constant dense<0.000000e+00> : vector<16xf32>
    %135 = vector.multi_reduction <add>, %132, %cst_67 [1] : vector<16x32xf32> to vector<16xf32>
    %136 = vector.shape_cast %135 : vector<16xf32> to vector<16x1xf32>
    %cst_68 = arith.constant 3.200000e+01 : f32
    %137 = vector.broadcast %cst_68 : f32 to vector<16x1xf32>
    %138 = arith.divf %136, %137 : vector<16x1xf32>
    %139 = vector.broadcast %138 : vector<16x1xf32> to vector<16x32xf32>
    %140 = arith.subf %132, %139 : vector<16x32xf32>
    %141 = arith.mulf %140, %140 : vector<16x32xf32>
    %cst_69 = arith.constant dense<0.000000e+00> : vector<16xf32>
    %142 = vector.multi_reduction <add>, %141, %cst_69 [1] : vector<16x32xf32> to vector<16xf32>
    %143 = vector.shape_cast %142 : vector<16xf32> to vector<16x1xf32>
    %cst_70 = arith.constant 3.200000e+01 : f32
    %144 = vector.broadcast %cst_70 : f32 to vector<16x1xf32>
    %145 = arith.divf %143, %144 : vector<16x1xf32>
    %cst_71 = arith.constant 9.99999996E-13 : f32
    %146 = vector.broadcast %cst_71 : f32 to vector<16x1xf32>
    %147 = arith.addf %145, %146 : vector<16x1xf32>
    %148 = math.rsqrt %147 : vector<16x1xf32>
    %149 = vector.broadcast %148 : vector<16x1xf32> to vector<16x32xf32>
    %150 = arith.mulf %140, %149 : vector<16x32xf32>
    %151 = vector.broadcast %133 : vector<1x32xf32> to vector<16x32xf32>
    %152 = arith.mulf %150, %151 : vector<16x32xf32>
    %153 = vector.broadcast %134 : vector<1x32xf32> to vector<16x32xf32>
    %154 = arith.addf %152, %153 : vector<16x32xf32>
    %155 = vector.shape_cast %154 : vector<16x32xf32> to vector<2x8x32xf32>
    %c0_72 = arith.constant 0 : index
    %c0_73 = arith.constant 0 : index
    %c0_74 = arith.constant 0 : index
    %156 = vector.load %arg15[%c0_72, %c0_73, %c0_74] : memref<2x8x32xf32, #tpu.memory_space<vmem>>, vector<2x8x32xf32>
    tpu.vector_store %arg15[%c0_72, %c0_73, %c0_74], %155 {strides = array<i32>} : memref<2x8x32xf32, #tpu.memory_space<vmem>>, vector<2x8x32xf32>,
    return
  }
  func.func @transform_0(%arg0: i32) -> (i32, i32, i32) {
    %c0_i32 = arith.constant 0 : i32
    %c0_i32_0 = arith.constant 0 : i32
    %c0_i32_1 = arith.constant 0 : i32
    return %arg0, %c0_i32, %c0_i32_0 : i32, i32, i32
  }
  func.func @transform_1(%arg0: i32) -> (i32, i32, i32) {
    %c0_i32 = arith.constant 0 : i32
    %c0_i32_0 = arith.constant 0 : i32
    %c0_i32_1 = arith.constant 0 : i32
    return %arg0, %c0_i32, %c0_i32_0 : i32, i32, i32
  }
  func.func @transform_2(%arg0: i32) -> (i32, i32) {
    %c0_i32 = arith.constant 0 : i32
    %c0_i32_0 = arith.constant 0 : i32
    %c0_i32_1 = arith.constant 0 : i32
    return %c0_i32, %c0_i32_0 : i32, i32
  }
  func.func @transform_3(%arg0: i32) -> (i32, i32) {
    %c0_i32 = arith.constant 0 : i32
    %c0_i32_0 = arith.constant 0 : i32
    %c0_i32_1 = arith.constant 0 : i32
    return %c0_i32, %c0_i32_0 : i32, i32
  }
  func.func @transform_4(%arg0: i32) -> (i32, i32) {
    %c0_i32 = arith.constant 0 : i32
    %c0_i32_0 = arith.constant 0 : i32
    %c0_i32_1 = arith.constant 0 : i32
    return %c0_i32, %c0_i32_0 : i32, i32
  }
  func.func @transform_5(%arg0: i32) -> (i32, i32) {
    %c0_i32 = arith.constant 0 : i32
    %c0_i32_0 = arith.constant 0 : i32
    %c0_i32_1 = arith.constant 0 : i32
    return %c0_i32, %c0_i32_0 : i32, i32
  }
  func.func @transform_6(%arg0: i32) -> (i32, i32) {
    %c0_i32 = arith.constant 0 : i32
    %c0_i32_0 = arith.constant 0 : i32
    %c0_i32_1 = arith.constant 0 : i32
    return %c0_i32, %c0_i32_0 : i32, i32
  }
  func.func @transform_7(%arg0: i32) -> (i32, i32) {
    %c0_i32 = arith.constant 0 : i32
    %c0_i32_0 = arith.constant 0 : i32
    %c0_i32_1 = arith.constant 0 : i32
    return %c0_i32, %c0_i32_0 : i32, i32
  }
  func.func @transform_8(%arg0: i32) -> (i32, i32) {
    %c0_i32 = arith.constant 0 : i32
    %c0_i32_0 = arith.constant 0 : i32
    %c0_i32_1 = arith.constant 0 : i32
    return %c0_i32, %c0_i32_0 : i32, i32
  }
  func.func @transform_9(%arg0: i32) -> (i32, i32) {
    %c0_i32 = arith.constant 0 : i32
    %c0_i32_0 = arith.constant 0 : i32
    %c0_i32_1 = arith.constant 0 : i32
    return %c0_i32, %c0_i32_0 : i32, i32
  }
  func.func @transform_10(%arg0: i32) -> (i32, i32) {
    %c0_i32 = arith.constant 0 : i32
    %c0_i32_0 = arith.constant 0 : i32
    %c0_i32_1 = arith.constant 0 : i32
    return %c0_i32, %c0_i32_0 : i32, i32
  }
  func.func @transform_11(%arg0: i32) -> (i32, i32) {
    %c0_i32 = arith.constant 0 : i32
    %c0_i32_0 = arith.constant 0 : i32
    %c0_i32_1 = arith.constant 0 : i32
    return %c0_i32, %c0_i32_0 : i32, i32
  }
  func.func @transform_12(%arg0: i32) -> (i32, i32) {
    %c0_i32 = arith.constant 0 : i32
    %c0_i32_0 = arith.constant 0 : i32
    %c0_i32_1 = arith.constant 0 : i32
    return %c0_i32, %c0_i32_0 : i32, i32
  }
  func.func @transform_13(%arg0: i32) -> (i32, i32) {
    %c0_i32 = arith.constant 0 : i32
    %c0_i32_0 = arith.constant 0 : i32
    %c0_i32_1 = arith.constant 0 : i32
    return %c0_i32, %c0_i32_0 : i32, i32
  }
  func.func @transform_14(%arg0: i32) -> (i32, i32, i32) {
    %c0_i32 = arith.constant 0 : i32
    %c0_i32_0 = arith.constant 0 : i32
    %c0_i32_1 = arith.constant 0 : i32
    return %arg0, %c0_i32, %c0_i32_0 : i32, i32, i32
  }
}

</mosaic_0001>

<llo_original>
// kernel: fwd.2
$region0: #{fwd.2}
  #allocation0 [shape = 'u32[]', space=smem, size = 0x4, offset = 0x4, fixed_abs, tag = 'smem constant byte address 0x4 - core index']
  #allocation1 [shape = 'u32[72,128]{1,0:T(1,128)}', space=vmem, size = 0x9000, scoped, tag = 'internal scratch']
  #allocation2 [shape = 'f32[2,8,32]{2,1,0:T(8,128)}', space=vmem, size = 0x2000, scoped, tag = 'scratch operand']
  %s0 = inlined_call_operand.vmem [shape: f32[2,8,32], index: 0, kind: input, shape index: {}]
  %s1 = inlined_call_operand.vmem [shape: f32[2,1,8], index: 1, kind: input, shape index: {}]
  %s2 = inlined_call_operand.vmem [shape: bf16[32,96], index: 2, kind: input, shape index: {}]
  %s3 = inlined_call_operand.vmem [shape: f32[1,96], index: 3, kind: input, shape index: {}]
  %s4 = inlined_call_operand.vmem [shape: bf16[32,32], index: 4, kind: input, shape index: {}]
  %s5 = inlined_call_operand.vmem [shape: f32[1,32], index: 5, kind: input, shape index: {}]
  %s6 = inlined_call_operand.vmem [shape: f32[1,32], index: 6, kind: input, shape index: {}]
  %s7 = inlined_call_operand.vmem [shape: f32[1,32], index: 7, kind: input, shape index: {}]
  %s8 = inlined_call_operand.vmem [shape: bf16[32,64], index: 8, kind: input, shape index: {}]
  %s9 = inlined_call_operand.vmem [shape: f32[1,64], index: 9, kind: input, shape index: {}]
  %s10 = inlined_call_operand.vmem [shape: bf16[64,32], index: 10, kind: input, shape index: {}]
  %s11 = inlined_call_operand.vmem [shape: f32[1,32], index: 11, kind: input, shape index: {}]
  %s12 = inlined_call_operand.vmem [shape: f32[1,32], index: 12, kind: input, shape index: {}]
  %s13 = inlined_call_operand.vmem [shape: f32[1,32], index: 13, kind: input, shape index: {}]
  %s14 = inlined_call_operand.vmem [shape: f32[2,8,32], index: 14, kind: output, shape index: {}]
  %s15 = sld [smem:[#allocation0]]
  $region66: #{fwd.2} parent=0
    _
  %s17 = ssub.s32 1, %s15
  %s18 = scalar_select 0, %s17, %s15
  // Predicated region
  $region2: #{fwd.2} parent=0 // pred_check
    _
  $region3: #{fwd.2} parent=0 // pred_check_branch
    %20 = sbr.rel (0) target = $region5
  $region4: #{fwd.2} parent=0 // pred_region
    _
  $region5: #{fwd.2} parent=0 // pred_fallthru
    _
  // Predicated region
  $region6: #{fwd.2} parent=0 // pred_check
    _
  $region7: #{fwd.2} parent=0 // pred_check_branch
    %22 = sbr.rel (0) target = $region9
  $region8: #{fwd.2} parent=0 // pred_region
    _
  $region9: #{fwd.2} parent=0 // pred_fallthru
    _
  // Predicated region
  $region10: #{fwd.2} parent=0 // pred_check
    _
  $region11: #{fwd.2} parent=0 // pred_check_branch
    %24 = sbr.rel (0) target = $region13
  $region12: #{fwd.2} parent=0 // pred_region
    _
  $region13: #{fwd.2} parent=0 // pred_fallthru
    _
  // Predicated region
  $region14: #{fwd.2} parent=0 // pred_check
    _
  $region15: #{fwd.2} parent=0 // pred_check_branch
    %26 = sbr.rel (0) target = $region17
  $region16: #{fwd.2} parent=0 // pred_region
    _
  $region17: #{fwd.2} parent=0 // pred_fallthru
    _
  // Predicated region
  $region18: #{fwd.2} parent=0 // pred_check
    _
  $region19: #{fwd.2} parent=0 // pred_check_branch
    %28 = sbr.rel (0) target = $region21
  $region20: #{fwd.2} parent=0 // pred_region
    _
  $region21: #{fwd.2} parent=0 // pred_fallthru
    _
  // Predicated region
  $region22: #{fwd.2} parent=0 // pred_check
    _
  $region23: #{fwd.2} parent=0 // pred_check_branch
    %30 = sbr.rel (0) target = $region25
  $region24: #{fwd.2} parent=0 // pred_region
    _
  $region25: #{fwd.2} parent=0 // pred_fallthru
    _
  // Predicated region
  $region26: #{fwd.2} parent=0 // pred_check
    _
  $region27: #{fwd.2} parent=0 // pred_check_branch
    %32 = sbr.rel (0) target = $region29
  $region28: #{fwd.2} parent=0 // pred_region
    _
  $region29: #{fwd.2} parent=0 // pred_fallthru
    _
  // Predicated region
  $region30: #{fwd.2} parent=0 // pred_check
    _
  $region31: #{fwd.2} parent=0 // pred_check_branch
    %34 = sbr.rel (0) target = $region33
  $region32: #{fwd.2} parent=0 // pred_region
    _
  $region33: #{fwd.2} parent=0 // pred_fallthru
    _
  // Predicated region
  $region34: #{fwd.2} parent=0 // pred_check
    _
  $region35: #{fwd.2} parent=0 // pred_check_branch
    %36 = sbr.rel (0) target = $region37
  $region36: #{fwd.2} parent=0 // pred_region
    _
  $region37: #{fwd.2} parent=0 // pred_fallthru
    _
  // Predicated region
  $region38: #{fwd.2} parent=0 // pred_check
    _
  $region39: #{fwd.2} parent=0 // pred_check_branch
    %38 = sbr.rel (0) target = $region41
  $region40: #{fwd.2} parent=0 // pred_region
    _
  $region41: #{fwd.2} parent=0 // pred_fallthru
    _
  // Predicated region
  $region42: #{fwd.2} parent=0 // pred_check
    _
  $region43: #{fwd.2} parent=0 // pred_check_branch
    %40 = sbr.rel (0) target = $region45
  $region44: #{fwd.2} parent=0 // pred_region
    _
  $region45: #{fwd.2} parent=0 // pred_fallthru
    _
  // Predicated region
  $region46: #{fwd.2} parent=0 // pred_check
    _
  $region47: #{fwd.2} parent=0 // pred_check_branch
    %42 = sbr.rel (0) target = $region49
  $region48: #{fwd.2} parent=0 // pred_region
    _
  $region49: #{fwd.2} parent=0 // pred_fallthru
    _
  // Predicated region
  $region50: #{fwd.2} parent=0 // pred_check
    _
  $region51: #{fwd.2} parent=0 // pred_check_branch
    %44 = sbr.rel (0) target = $region53
  $region52: #{fwd.2} parent=0 // pred_region
    _
  $region53: #{fwd.2} parent=0 // pred_fallthru
    _
  // Predicated region
  $region54: #{fwd.2} parent=0 // pred_check
    _
  $region55: #{fwd.2} parent=0 // pred_check_branch
    %46 = sbr.rel (0) target = $region57
  $region56: #{fwd.2} parent=0 // pred_region
    _
  $region57: #{fwd.2} parent=0 // pred_fallthru
    _
  %v48 = vld [vmem:[%s0] sm:$0xff]
  %v49 = vld [vmem:[%s0 + $0x8] sm:$0xff]
  %v50 = vpack.c.bf16 %v49, %v48
  %v51 = vld [vmem:[%s2] sm:$0xf]
  %v52 = vld [vmem:[%s2 + $0x4] sm:$0xf]
  %v53 = vld [vmem:[%s2 + $0x8] sm:$0xf]
  %v54 = vld [vmem:[%s2 + $0xc] sm:$0xf]
  %v55 = vld [vmem:[%s3] sm:$0x1]
  %v57 = vperm.slane %v55, 0
  %v63 = vunpack.c.l.b16 %v51
  %v64 = vunpack.c.l.b16 %v52
  %v65 = vunpack.c.l.b16 %v53
  %v66 = vunpack.c.l.b16 %v54
  %v67 = vpack.c.b16 %v64, %v63
  %v68 = vpack.c.b16 %v66, %v65
  %vm71 = vcmask 261120
  %v73 = vsel %vm71, %v50, 0
  %75 = vmatpush.bf16.msra.mxu0 0
  %76 = vmatpush.bf16.msra.mxu0 0
  %77 = vmatpush.bf16.msra.mxu0 0
  %78 = vmatpush.bf16.msra.mxu0 0
  %79 = vmatpush.bf16.msra.mxu0 0
  %80 = vmatpush.bf16.msra.mxu0 0
  %81 = vmatpush.bf16.msra.mxu0 %v68
  %82 = vmatpush.bf16.msra.mxu0 %v67
  %83 = vmatmul.bf16.gmra.mxu0 %v73
  %v84 = vpop.f32.mrf.mxu0
  %v85 = vadd.f32 %v57, %v84
  %v86 = vpop.f32.mrf.mxu0
  %v87 = vadd.f32 %v57, %v86
  %88 = vdwg.mxu0
  %v89 = vmul.f32 %v85, 0.35355338
  %v90 = vmul.f32 %v87, 0.35355338
  %v91 = vld [vmem:[%s1] sm:$0x1]
  %v92 = vld [vmem:[%s1 + $0x1] sm:$0x1]
  %v95 = vperm.slane %v91, 0
  %v96 = vperm.slane %v92, 0
  %100 = vrot.lane.b32.xlu0 %v85, 96
  %v101 = vpop.permute.xlu0 %100
  %vm102 = vcmask 64512
  %v104 = vsel %vm102, %v89, 0
  %v106 = vsel %vm102, %v101, 0
  %108 = vmatpush.xpose.msra.mxu0 0.0
  %109 = vmatpush.xpose.msra.mxu0 0.0
  %110 = vmatpush.xpose.msra.mxu0 0.0
  %111 = vmatpush.xpose.msra.mxu0 0.0
  %112 = vmatpush.xpose.msra.mxu0 0.0
  %113 = vmatpush.xpose.msra.mxu0 0.0
  %114 = vmatpush.xpose.msra.mxu0 0.0
  %115 = vmatpush.xpose.msra.mxu0 0.0
  %116 = vmatpush.xpose.msra.mxu0 0.0
  %117 = vmatpush.xpose.msra.mxu0 0.0
  %118 = vmatpush.xpose.msra.mxu0 0.0
  %119 = vmatpush.xpose.msra.mxu0 0.0
  %120 = vmatpush.xpose.msra.mxu0 0.0
  %121 = vmatpush.xpose.msra.mxu0 0.0
  %122 = vmatpush.xpose.msra.mxu0 0.0
  %123 = vmatpush.xpose.msra.mxu0 %v106
  %124 = vmatmul.f32.gmra.mxu0 %v104
  %v125 = vpop.f32.mrf.mxu0
  %v126 = vadd.f32 %v95, %v125
  %127 = vdwg.mxu0
  %129 = vrot.lane.b32.xlu0 %v87, 96
  %v130 = vpop.permute.xlu0 %129
  %v132 = vsel %vm102, %v90, 0
  %v134 = vsel %vm102, %v130, 0
  %136 = vmatpush.xpose.msra.mxu0 0.0
  %137 = vmatpush.xpose.msra.mxu0 0.0
  %138 = vmatpush.xpose.msra.mxu0 0.0
  %139 = vmatpush.xpose.msra.mxu0 0.0
  %140 = vmatpush.xpose.msra.mxu0 0.0
  %141 = vmatpush.xpose.msra.mxu0 0.0
  %142 = vmatpush.xpose.msra.mxu0 0.0
  %143 = vmatpush.xpose.msra.mxu0 0.0
  %144 = vmatpush.xpose.msra.mxu0 0.0
  %145 = vmatpush.xpose.msra.mxu0 0.0
  %146 = vmatpush.xpose.msra.mxu0 0.0
  %147 = vmatpush.xpose.msra.mxu0 0.0
  %148 = vmatpush.xpose.msra.mxu0 0.0
  %149 = vmatpush.xpose.msra.mxu0 0.0
  %150 = vmatpush.xpose.msra.mxu0 0.0
  %151 = vmatpush.xpose.msra.mxu0 %v134
  %152 = vmatmul.f32.gmra.mxu0 %v132
  %v153 = vpop.f32.mrf.mxu0
  %v154 = vadd.f32 %v96, %v153
  %155 = vdwg.mxu0
  %v156 = vsel %vm102, %v126, -inf
  %157 = vmax.xlane.f32.xlu0 %v156
  %v158 = vpop.xlane.xlu0 %157
  %v159 = vsel %vm102, %v154, -inf
  %160 = vmax.xlane.f32.xlu0 %v159
  %v161 = vpop.xlane.xlu0 %160
  %v162 = vsub.f32 %v126, %v158
  %v163 = vsub.f32 %v154, %v161
  %v164 = vmul.f32 %v162, 1.442695
  %v165 = vpow.pop %v164
  %v166 = vmul.f32 %v163, 1.442695
  %v167 = vpow.pop %v166
  %v168 = vsel %vm102, %v165, 0.0
  %169 = vadd.xlane.f32.xlu0 %v168
  %v170 = vpop.xlane.xlu0 %169
  %v171 = vsel %vm102, %v167, 0.0
  %172 = vadd.xlane.f32.xlu0 %v171
  %v173 = vpop.xlane.xlu0 %172
  %v174 = vrcp.pop %v170
  %v175 = vrcp.pop %v173
  %v176 = vmul.f32 %v165, %v174
  %v177 = vmul.f32 %v167, %v175
  %178 = vrot.lane.b32.xlu0 %v85, 64
  %v179 = vpop.permute.xlu0 %178
  %v182 = vsel %vm102, %v176, 0
  %184 = vmatpush.msra.mxu0 0.0
  %185 = vmatpush.msra.mxu0 0.0
  %186 = vmatpush.msra.mxu0 0.0
  %187 = vmatpush.msra.mxu0 0.0
  %188 = vmatpush.msra.mxu0 0.0
  %189 = vmatpush.msra.mxu0 0.0
  %190 = vmatpush.msra.mxu0 0.0
  %191 = vmatpush.msra.mxu0 0.0
  %192 = vmatpush.msra.mxu0 0.0
  %193 = vmatpush.msra.mxu0 0.0
  %194 = vmatpush.msra.mxu0 0.0
  %195 = vmatpush.msra.mxu0 0.0
  %196 = vmatpush.msra.mxu0 0.0
  %197 = vmatpush.msra.mxu0 0.0
  %198 = vmatpush.msra.mxu0 0.0
  %199 = vmatpush.msra.mxu0 %v179
  %200 = vmatmul.f32.gmra.mxu0 %v182
  %v201 = vpop.f32.mrf.mxu0
  %v202 = vadd.f32 0.0, %v201
  %203 = vdwg.mxu0
  %204 = vrot.lane.b32.xlu0 %v87, 64
  %v205 = vpop.permute.xlu0 %204
  %v208 = vsel %vm102, %v177, 0
  %210 = vmatpush.msra.mxu0 0.0
  %211 = vmatpush.msra.mxu0 0.0
  %212 = vmatpush.msra.mxu0 0.0
  %213 = vmatpush.msra.mxu0 0.0
  %214 = vmatpush.msra.mxu0 0.0
  %215 = vmatpush.msra.mxu0 0.0
  %216 = vmatpush.msra.mxu0 0.0
  %217 = vmatpush.msra.mxu0 0.0
  %218 = vmatpush.msra.mxu0 0.0
  %219 = vmatpush.msra.mxu0 0.0
  %220 = vmatpush.msra.mxu0 0.0
  %221 = vmatpush.msra.mxu0 0.0
  %222 = vmatpush.msra.mxu0 0.0
  %223 = vmatpush.msra.mxu0 0.0
  %224 = vmatpush.msra.mxu0 0.0
  %225 = vmatpush.msra.mxu0 %v205
  %226 = vmatmul.f32.gmra.mxu0 %v208
  %v227 = vpop.f32.mrf.mxu0
  %v228 = vadd.f32 0.0, %v227
  %229 = vdwg.mxu0
  %230 = vst.msk [vmem:[#allocation2] sm:$0xff] %vm102, %v202
  %231 = vst.msk [vmem:[#allocation2 + $0x8] sm:$0xff] %vm102, %v228
  %232 = vrot.lane.b32.xlu0 %v89, 120
  %v233 = vpop.permute.xlu0 %232
  %234 = vrot.lane.b32.xlu0 %v85, 88
  %v235 = vpop.permute.xlu0 %234
  %v236 = vsel %vm102, %v233, 0
  %v238 = vsel %vm102, %v235, 0
  %240 = vmatpush.xpose.msra.mxu0 0.0
  %241 = vmatpush.xpose.msra.mxu0 0.0
  %242 = vmatpush.xpose.msra.mxu0 0.0
  %243 = vmatpush.xpose.msra.mxu0 0.0
  %244 = vmatpush.xpose.msra.mxu0 0.0
  %245 = vmatpush.xpose.msra.mxu0 0.0
  %246 = vmatpush.xpose.msra.mxu0 0.0
  %247 = vmatpush.xpose.msra.mxu0 0.0
  %248 = vmatpush.xpose.msra.mxu0 0.0
  %249 = vmatpush.xpose.msra.mxu0 0.0
  %250 = vmatpush.xpose.msra.mxu0 0.0
  %251 = vmatpush.xpose.msra.mxu0 0.0
  %252 = vmatpush.xpose.msra.mxu0 0.0
  %253 = vmatpush.xpose.msra.mxu0 0.0
  %254 = vmatpush.xpose.msra.mxu0 0.0
  %255 = vmatpush.xpose.msra.mxu0 %v238
  %256 = vmatmul.f32.gmra.mxu0 %v236
  %v257 = vpop.f32.mrf.mxu0
  %v258 = vadd.f32 %v95, %v257
  %259 = vdwg.mxu0
  %260 = vrot.lane.b32.xlu0 %v90, 120
  %v261 = vpop.permute.xlu0 %260
  %262 = vrot.lane.b32.xlu0 %v87, 88
  %v263 = vpop.permute.xlu0 %262
  %v264 = vsel %vm102, %v261, 0
  %v266 = vsel %vm102, %v263, 0
  %268 = vmatpush.xpose.msra.mxu0 0.0
  %269 = vmatpush.xpose.msra.mxu0 0.0
  %270 = vmatpush.xpose.msra.mxu0 0.0
  %271 = vmatpush.xpose.msra.mxu0 0.0
  %272 = vmatpush.xpose.msra.mxu0 0.0
  %273 = vmatpush.xpose.msra.mxu0 0.0
  %274 = vmatpush.xpose.msra.mxu0 0.0
  %275 = vmatpush.xpose.msra.mxu0 0.0
  %276 = vmatpush.xpose.msra.mxu0 0.0
  %277 = vmatpush.xpose.msra.mxu0 0.0
  %278 = vmatpush.xpose.msra.mxu0 0.0
  %279 = vmatpush.xpose.msra.mxu0 0.0
  %280 = vmatpush.xpose.msra.mxu0 0.0
  %281 = vmatpush.xpose.msra.mxu0 0.0
  %282 = vmatpush.xpose.msra.mxu0 0.0
  %283 = vmatpush.xpose.msra.mxu0 %v266
  %284 = vmatmul.f32.gmra.mxu0 %v264
  %v285 = vpop.f32.mrf.mxu0
  %v286 = vadd.f32 %v96, %v285
  %287 = vdwg.mxu0
  %v288 = vsel %vm102, %v258, -inf
  %289 = vmax.xlane.f32.xlu0 %v288
  %v290 = vpop.xlane.xlu0 %289
  %v291 = vsel %vm102, %v286, -inf
  %292 = vmax.xlane.f32.xlu0 %v291
  %v293 = vpop.xlane.xlu0 %292
  %v294 = vsub.f32 %v258, %v290
  %v295 = vsub.f32 %v286, %v293
  %v296 = vmul.f32 %v294, 1.442695
  %v297 = vpow.pop %v296
  %v298 = vmul.f32 %v295, 1.442695
  %v299 = vpow.pop %v298
  %v300 = vsel %vm102, %v297, 0.0
  %301 = vadd.xlane.f32.xlu0 %v300
  %v302 = vpop.xlane.xlu0 %301
  %v303 = vsel %vm102, %v299, 0.0
  %304 = vadd.xlane.f32.xlu0 %v303
  %v305 = vpop.xlane.xlu0 %304
  %v306 = vrcp.pop %v302
  %v307 = vrcp.pop %v305
  %v308 = vmul.f32 %v297, %v306
  %v309 = vmul.f32 %v299, %v307
  %310 = vrot.lane.b32.xlu0 %v85, 56
  %v311 = vpop.permute.xlu0 %310
  %v314 = vsel %vm102, %v308, 0
  %316 = vmatpush.msra.mxu0 0.0
  %317 = vmatpush.msra.mxu0 0.0
  %318 = vmatpush.msra.mxu0 0.0
  %319 = vmatpush.msra.mxu0 0.0
  %320 = vmatpush.msra.mxu0 0.0
  %321 = vmatpush.msra.mxu0 0.0
  %322 = vmatpush.msra.mxu0 0.0
  %323 = vmatpush.msra.mxu0 0.0
  %324 = vmatpush.msra.mxu0 0.0
  %325 = vmatpush.msra.mxu0 0.0
  %326 = vmatpush.msra.mxu0 0.0
  %327 = vmatpush.msra.mxu0 0.0
  %328 = vmatpush.msra.mxu0 0.0
  %329 = vmatpush.msra.mxu0 0.0
  %330 = vmatpush.msra.mxu0 0.0
  %331 = vmatpush.msra.mxu0 %v311
  %332 = vmatmul.f32.gmra.mxu0 %v314
  %v333 = vpop.f32.mrf.mxu0
  %v334 = vadd.f32 0.0, %v333
  %335 = vdwg.mxu0
  %336 = vrot.lane.b32.xlu0 %v87, 56
  %v337 = vpop.permute.xlu0 %336
  %v340 = vsel %vm102, %v309, 0
  %342 = vmatpush.msra.mxu0 0.0
  %343 = vmatpush.msra.mxu0 0.0
  %344 = vmatpush.msra.mxu0 0.0
  %345 = vmatpush.msra.mxu0 0.0
  %346 = vmatpush.msra.mxu0 0.0
  %347 = vmatpush.msra.mxu0 0.0
  %348 = vmatpush.msra.mxu0 0.0
  %349 = vmatpush.msra.mxu0 0.0
  %350 = vmatpush.msra.mxu0 0.0
  %351 = vmatpush.msra.mxu0 0.0
  %352 = vmatpush.msra.mxu0 0.0
  %353 = vmatpush.msra.mxu0 0.0
  %354 = vmatpush.msra.mxu0 0.0
  %355 = vmatpush.msra.mxu0 0.0
  %356 = vmatpush.msra.mxu0 0.0
  %357 = vmatpush.msra.mxu0 %v337
  %358 = vmatmul.f32.gmra.mxu0 %v340
  %v359 = vpop.f32.mrf.mxu0
  %v360 = vadd.f32 0.0, %v359
  %361 = vdwg.mxu0
  %364 = vrot.lane.b32.xlu0 %v334, 8
  %v365 = vpop.permute.xlu0 %364
  %366 = vrot.lane.b32.xlu0 %v360, 8
  %v367 = vpop.permute.xlu0 %366
  %vm370 = vcmask 130112
  %371 = vst.msk [vmem:[#allocation2] sm:$0xff] %vm370, %v365
  %372 = vst.msk [vmem:[#allocation2 + $0x8] sm:$0xff] %vm370, %v367
  %373 = vrot.lane.b32.xlu0 %v89, 112
  %v374 = vpop.permute.xlu0 %373
  %375 = vrot.lane.b32.xlu0 %v85, 80
  %v376 = vpop.permute.xlu0 %375
  %v377 = vsel %vm102, %v374, 0
  %v379 = vsel %vm102, %v376, 0
  %381 = vmatpush.xpose.msra.mxu0 0.0
  %382 = vmatpush.xpose.msra.mxu0 0.0
  %383 = vmatpush.xpose.msra.mxu0 0.0
  %384 = vmatpush.xpose.msra.mxu0 0.0
  %385 = vmatpush.xpose.msra.mxu0 0.0
  %386 = vmatpush.xpose.msra.mxu0 0.0
  %387 = vmatpush.xpose.msra.mxu0 0.0
  %388 = vmatpush.xpose.msra.mxu0 0.0
  %389 = vmatpush.xpose.msra.mxu0 0.0
  %390 = vmatpush.xpose.msra.mxu0 0.0
  %391 = vmatpush.xpose.msra.mxu0 0.0
  %392 = vmatpush.xpose.msra.mxu0 0.0
  %393 = vmatpush.xpose.msra.mxu0 0.0
  %394 = vmatpush.xpose.msra.mxu0 0.0
  %395 = vmatpush.xpose.msra.mxu0 0.0
  %396 = vmatpush.xpose.msra.mxu0 %v379
  %397 = vmatmul.f32.gmra.mxu0 %v377
  %v398 = vpop.f32.mrf.mxu0
  %v399 = vadd.f32 %v95, %v398
  %400 = vdwg.mxu0
  %401 = vrot.lane.b32.xlu0 %v90, 112
  %v402 = vpop.permute.xlu0 %401
  %403 = vrot.lane.b32.xlu0 %v87, 80
  %v404 = vpop.permute.xlu0 %403
  %v405 = vsel %vm102, %v402, 0
  %v407 = vsel %vm102, %v404, 0
  %409 = vmatpush.xpose.msra.mxu0 0.0
  %410 = vmatpush.xpose.msra.mxu0 0.0
  %411 = vmatpush.xpose.msra.mxu0 0.0
  %412 = vmatpush.xpose.msra.mxu0 0.0
  %413 = vmatpush.xpose.msra.mxu0 0.0
  %414 = vmatpush.xpose.msra.mxu0 0.0
  %415 = vmatpush.xpose.msra.mxu0 0.0
  %416 = vmatpush.xpose.msra.mxu0 0.0
  %417 = vmatpush.xpose.msra.mxu0 0.0
  %418 = vmatpush.xpose.msra.mxu0 0.0
  %419 = vmatpush.xpose.msra.mxu0 0.0
  %420 = vmatpush.xpose.msra.mxu0 0.0
  %421 = vmatpush.xpose.msra.mxu0 0.0
  %422 = vmatpush.xpose.msra.mxu0 0.0
  %423 = vmatpush.xpose.msra.mxu0 0.0
  %424 = vmatpush.xpose.msra.mxu0 %v407
  %425 = vmatmul.f32.gmra.mxu0 %v405
  %v426 = vpop.f32.mrf.mxu0
  %v427 = vadd.f32 %v96, %v426
  %428 = vdwg.mxu0
  %v429 = vsel %vm102, %v399, -inf
  %430 = vmax.xlane.f32.xlu0 %v429
  %v431 = vpop.xlane.xlu0 %430
  %v432 = vsel %vm102, %v427, -inf
  %433 = vmax.xlane.f32.xlu0 %v432
  %v434 = vpop.xlane.xlu0 %433
  %v435 = vsub.f32 %v399, %v431
  %v436 = vsub.f32 %v427, %v434
  %v437 = vmul.f32 %v435, 1.442695
  %v438 = vpow.pop %v437
  %v439 = vmul.f32 %v436, 1.442695
  %v440 = vpow.pop %v439
  %v441 = vsel %vm102, %v438, 0.0
  %442 = vadd.xlane.f32.xlu0 %v441
  %v443 = vpop.xlane.xlu0 %442
  %v444 = vsel %vm102, %v440, 0.0
  %445 = vadd.xlane.f32.xlu0 %v444
  %v446 = vpop.xlane.xlu0 %445
  %v447 = vrcp.pop %v443
  %v448 = vrcp.pop %v446
  %v449 = vmul.f32 %v438, %v447
  %v450 = vmul.f32 %v440, %v448
  %451 = vrot.lane.b32.xlu0 %v85, 48
  %v452 = vpop.permute.xlu0 %451
  %v455 = vsel %vm102, %v449, 0
  %457 = vmatpush.msra.mxu0 0.0
  %458 = vmatpush.msra.mxu0 0.0
  %459 = vmatpush.msra.mxu0 0.0
  %460 = vmatpush.msra.mxu0 0.0
  %461 = vmatpush.msra.mxu0 0.0
  %462 = vmatpush.msra.mxu0 0.0
  %463 = vmatpush.msra.mxu0 0.0
  %464 = vmatpush.msra.mxu0 0.0
  %465 = vmatpush.msra.mxu0 0.0
  %466 = vmatpush.msra.mxu0 0.0
  %467 = vmatpush.msra.mxu0 0.0
  %468 = vmatpush.msra.mxu0 0.0
  %469 = vmatpush.msra.mxu0 0.0
  %470 = vmatpush.msra.mxu0 0.0
  %471 = vmatpush.msra.mxu0 0.0
  %472 = vmatpush.msra.mxu0 %v452
  %473 = vmatmul.f32.gmra.mxu0 %v455
  %v474 = vpop.f32.mrf.mxu0
  %v475 = vadd.f32 0.0, %v474
  %476 = vdwg.mxu0
  %477 = vrot.lane.b32.xlu0 %v87, 48
  %v478 = vpop.permute.xlu0 %477
  %v481 = vsel %vm102, %v450, 0
  %483 = vmatpush.msra.mxu0 0.0
  %484 = vmatpush.msra.mxu0 0.0
  %485 = vmatpush.msra.mxu0 0.0
  %486 = vmatpush.msra.mxu0 0.0
  %487 = vmatpush.msra.mxu0 0.0
  %488 = vmatpush.msra.mxu0 0.0
  %489 = vmatpush.msra.mxu0 0.0
  %490 = vmatpush.msra.mxu0 0.0
  %491 = vmatpush.msra.mxu0 0.0
  %492 = vmatpush.msra.mxu0 0.0
  %493 = vmatpush.msra.mxu0 0.0
  %494 = vmatpush.msra.mxu0 0.0
  %495 = vmatpush.msra.mxu0 0.0
  %496 = vmatpush.msra.mxu0 0.0
  %497 = vmatpush.msra.mxu0 0.0
  %498 = vmatpush.msra.mxu0 %v478
  %499 = vmatmul.f32.gmra.mxu0 %v481
  %v500 = vpop.f32.mrf.mxu0
  %v501 = vadd.f32 0.0, %v500
  %502 = vdwg.mxu0
  %505 = vrot.lane.b32.xlu0 %v475, 16
  %v506 = vpop.permute.xlu0 %505
  %507 = vrot.lane.b32.xlu0 %v501, 16
  %v508 = vpop.permute.xlu0 %507
  %vm511 = vcmask 195712
  %512 = vst.msk [vmem:[#allocation2] sm:$0xff] %vm511, %v506
  %513 = vst.msk [vmem:[#allocation2 + $0x8] sm:$0xff] %vm511, %v508
  %514 = vrot.lane.b32.xlu0 %v89, 104
  %v515 = vpop.permute.xlu0 %514
  %516 = vrot.lane.b32.xlu0 %v85, 72
  %v517 = vpop.permute.xlu0 %516
  %v518 = vsel %vm102, %v515, 0
  %v520 = vsel %vm102, %v517, 0
  %522 = vmatpush.xpose.msra.mxu0 0.0
  %523 = vmatpush.xpose.msra.mxu0 0.0
  %524 = vmatpush.xpose.msra.mxu0 0.0
  %525 = vmatpush.xpose.msra.mxu0 0.0
  %526 = vmatpush.xpose.msra.mxu0 0.0
  %527 = vmatpush.xpose.msra.mxu0 0.0
  %528 = vmatpush.xpose.msra.mxu0 0.0
  %529 = vmatpush.xpose.msra.mxu0 0.0
  %530 = vmatpush.xpose.msra.mxu0 0.0
  %531 = vmatpush.xpose.msra.mxu0 0.0
  %532 = vmatpush.xpose.msra.mxu0 0.0
  %533 = vmatpush.xpose.msra.mxu0 0.0
  %534 = vmatpush.xpose.msra.mxu0 0.0
  %535 = vmatpush.xpose.msra.mxu0 0.0
  %536 = vmatpush.xpose.msra.mxu0 0.0
  %537 = vmatpush.xpose.msra.mxu0 %v520
  %538 = vmatmul.f32.gmra.mxu0 %v518
  %v539 = vpop.f32.mrf.mxu0
  %v540 = vadd.f32 %v95, %v539
  %541 = vdwg.mxu0
  %542 = vrot.lane.b32.xlu0 %v90, 104
  %v543 = vpop.permute.xlu0 %542
  %544 = vrot.lane.b32.xlu0 %v87, 72
  %v545 = vpop.permute.xlu0 %544
  %v546 = vsel %vm102, %v543, 0
  %v548 = vsel %vm102, %v545, 0
  %550 = vmatpush.xpose.msra.mxu0 0.0
  %551 = vmatpush.xpose.msra.mxu0 0.0
  %552 = vmatpush.xpose.msra.mxu0 0.0
  %553 = vmatpush.xpose.msra.mxu0 0.0
  %554 = vmatpush.xpose.msra.mxu0 0.0
  %555 = vmatpush.xpose.msra.mxu0 0.0
  %556 = vmatpush.xpose.msra.mxu0 0.0
  %557 = vmatpush.xpose.msra.mxu0 0.0
  %558 = vmatpush.xpose.msra.mxu0 0.0
  %559 = vmatpush.xpose.msra.mxu0 0.0
  %560 = vmatpush.xpose.msra.mxu0 0.0
  %561 = vmatpush.xpose.msra.mxu0 0.0
  %562 = vmatpush.xpose.msra.mxu0 0.0
  %563 = vmatpush.xpose.msra.mxu0 0.0
  %564 = vmatpush.xpose.msra.mxu0 0.0
  %565 = vmatpush.xpose.msra.mxu0 %v548
  %566 = vmatmul.f32.gmra.mxu0 %v546
  %v567 = vpop.f32.mrf.mxu0
  %v568 = vadd.f32 %v96, %v567
  %569 = vdwg.mxu0
  %v570 = vsel %vm102, %v540, -inf
  %571 = vmax.xlane.f32.xlu0 %v570
  %v572 = vpop.xlane.xlu0 %571
  %v573 = vsel %vm102, %v568, -inf
  %574 = vmax.xlane.f32.xlu0 %v573
  %v575 = vpop.xlane.xlu0 %574
  %v576 = vsub.f32 %v540, %v572
  %v577 = vsub.f32 %v568, %v575
  %v578 = vmul.f32 %v576, 1.442695
  %v579 = vpow.pop %v578
  %v580 = vmul.f32 %v577, 1.442695
  %v581 = vpow.pop %v580
  %v582 = vsel %vm102, %v579, 0.0
  %583 = vadd.xlane.f32.xlu0 %v582
  %v584 = vpop.xlane.xlu0 %583
  %v585 = vsel %vm102, %v581, 0.0
  %586 = vadd.xlane.f32.xlu0 %v585
  %v587 = vpop.xlane.xlu0 %586
  %v588 = vrcp.pop %v584
  %v589 = vrcp.pop %v587
  %v590 = vmul.f32 %v579, %v588
  %v591 = vmul.f32 %v581, %v589
  %592 = vrot.lane.b32.xlu0 %v85, 40
  %v593 = vpop.permute.xlu0 %592
  %v596 = vsel %vm102, %v590, 0
  %598 = vmatpush.msra.mxu0 0.0
  %599 = vmatpush.msra.mxu0 0.0
  %600 = vmatpush.msra.mxu0 0.0
  %601 = vmatpush.msra.mxu0 0.0
  %602 = vmatpush.msra.mxu0 0.0
  %603 = vmatpush.msra.mxu0 0.0
  %604 = vmatpush.msra.mxu0 0.0
  %605 = vmatpush.msra.mxu0 0.0
  %606 = vmatpush.msra.mxu0 0.0
  %607 = vmatpush.msra.mxu0 0.0
  %608 = vmatpush.msra.mxu0 0.0
  %609 = vmatpush.msra.mxu0 0.0
  %610 = vmatpush.msra.mxu0 0.0
  %611 = vmatpush.msra.mxu0 0.0
  %612 = vmatpush.msra.mxu0 0.0
  %613 = vmatpush.msra.mxu0 %v593
  %614 = vmatmul.f32.gmra.mxu0 %v596
  %v615 = vpop.f32.mrf.mxu0
  %v616 = vadd.f32 0.0, %v615
  %617 = vdwg.mxu0
  %618 = vrot.lane.b32.xlu0 %v87, 40
  %v619 = vpop.permute.xlu0 %618
  %v622 = vsel %vm102, %v591, 0
  %624 = vmatpush.msra.mxu0 0.0
  %625 = vmatpush.msra.mxu0 0.0
  %626 = vmatpush.msra.mxu0 0.0
  %627 = vmatpush.msra.mxu0 0.0
  %628 = vmatpush.msra.mxu0 0.0
  %629 = vmatpush.msra.mxu0 0.0
  %630 = vmatpush.msra.mxu0 0.0
  %631 = vmatpush.msra.mxu0 0.0
  %632 = vmatpush.msra.mxu0 0.0
  %633 = vmatpush.msra.mxu0 0.0
  %634 = vmatpush.msra.mxu0 0.0
  %635 = vmatpush.msra.mxu0 0.0
  %636 = vmatpush.msra.mxu0 0.0
  %637 = vmatpush.msra.mxu0 0.0
  %638 = vmatpush.msra.mxu0 0.0
  %639 = vmatpush.msra.mxu0 %v619
  %640 = vmatmul.f32.gmra.mxu0 %v622
  %v641 = vpop.f32.mrf.mxu0
  %v642 = vadd.f32 0.0, %v641
  %643 = vdwg.mxu0
  %646 = vrot.lane.b32.xlu0 %v616, 24
  %v647 = vpop.permute.xlu0 %646
  %648 = vrot.lane.b32.xlu0 %v642, 24
  %v649 = vpop.permute.xlu0 %648
  %vm652 = vcmask 261312
  %653 = vst.msk [vmem:[#allocation2] sm:$0xff] %vm652, %v647
  %654 = vst.msk [vmem:[#allocation2 + $0x8] sm:$0xff] %vm652, %v649
  %v655 = vld [vmem:[#allocation2] sm:$0xff]
  %v656 = vld [vmem:[#allocation2 + $0x8] sm:$0xff]
  %v657 = vpack.c.bf16 %v656, %v655
  %v658 = vld [vmem:[%s4] sm:$0xf]
  %v659 = vld [vmem:[%s4 + $0x4] sm:$0xf]
  %v660 = vld [vmem:[%s4 + $0x8] sm:$0xf]
  %v661 = vld [vmem:[%s4 + $0xc] sm:$0xf]
  %v662 = vld [vmem:[%s5] sm:$0x1]
  %v664 = vperm.slane %v662, 0
  %v670 = vunpack.c.l.b16 %v658
  %v671 = vunpack.c.l.b16 %v659
  %v672 = vunpack.c.l.b16 %v660
  %v673 = vunpack.c.l.b16 %v661
  %v674 = vpack.c.b16 %v671, %v670
  %v675 = vpack.c.b16 %v673, %v672
  %v679 = vsel %vm71, %v657, 0
  %681 = vmatpush.bf16.msra.mxu0 0
  %682 = vmatpush.bf16.msra.mxu0 0
  %683 = vmatpush.bf16.msra.mxu0 0
  %684 = vmatpush.bf16.msra.mxu0 0
  %685 = vmatpush.bf16.msra.mxu0 0
  %686 = vmatpush.bf16.msra.mxu0 0
  %687 = vmatpush.bf16.msra.mxu0 %v675
  %688 = vmatpush.bf16.msra.mxu0 %v674
  %689 = vmatmul.bf16.gmra.mxu0 %v679
  %v690 = vpop.f32.mrf.mxu0
  %v691 = vadd.f32 %v664, %v690
  %v692 = vpop.f32.mrf.mxu0
  %v693 = vadd.f32 %v664, %v692
  %694 = vdwg.mxu0
  %v695 = vld [vmem:[%s6] sm:$0x1]
  %v696 = vld [vmem:[%s7] sm:$0x1]
  %v697 = vsel %vm71, %v691, 0.0
  %698 = vadd.xlane.f32.xlu0 %v697
  %v699 = vpop.xlane.xlu0 %698
  %v700 = vsel %vm71, %v693, 0.0
  %701 = vadd.xlane.f32.xlu0 %v700
  %v702 = vpop.xlane.xlu0 %701
  %v703 = vrcp.pop 32.0
  %v704 = vmul.f32 32.0, %v703
  %v705 = vsub.f32 1.0, %v704
  %v706 = vmul.f32 %v703, %v705
  %v707 = vadd.f32 %v703, %v706
  %vm708 = vweird.f32 %v703
  %v709 = vsel %vm708, %v703, %v707
  %v710 = vmul.f32 %v699, %v709
  %v711 = vmul.f32 %v702, %v709
  %v712 = vsub.f32 %v691, %v710
  %v713 = vsub.f32 %v693, %v711
  %v714 = vmul.f32 %v712, %v712
  %v715 = vmul.f32 %v713, %v713
  %v716 = vsel %vm71, %v714, 0.0
  %717 = vadd.xlane.f32.xlu0 %v716
  %v718 = vpop.xlane.xlu0 %717
  %v719 = vsel %vm71, %v715, 0.0
  %720 = vadd.xlane.f32.xlu0 %v719
  %v721 = vpop.xlane.xlu0 %720
  %v722 = vmul.f32 %v718, %v709
  %v723 = vmul.f32 %v721, %v709
  %v724 = vadd.f32 %v722, 1e-12
  %v725 = vadd.f32 %v723, 1e-12
  %v726 = vrsqrt.pop %v724
  %v727 = vmul.f32 %v726, %v724
  %v728 = vmul.f32 %v727, %v726
  %v729 = vmul.f32 0.5, %v728
  %v730 = vsub.f32 1.5, %v729
  %v731 = vmul.f32 %v726, %v730
  %vm732 = vweird.f32 %v724
  %vm733 = vweird.f32 %v726
  %vm734 = vmor %vm732, %vm733
  %v735 = vsel %vm734, %v726, %v731
  %v736 = vrsqrt.pop %v725
  %v737 = vmul.f32 %v736, %v725
  %v738 = vmul.f32 %v737, %v736
  %v739 = vmul.f32 0.5, %v738
  %v740 = vsub.f32 1.5, %v739
  %v741 = vmul.f32 %v736, %v740
  %vm742 = vweird.f32 %v725
  %vm743 = vweird.f32 %v736
  %vm744 = vmor %vm742, %vm743
  %v745 = vsel %vm744, %v736, %v741
  %v746 = vmul.f32 %v712, %v735
  %v747 = vmul.f32 %v713, %v745
  %v749 = vperm.slane %v695, 0
  %v751 = vmul.f32 %v746, %v749
  %v752 = vmul.f32 %v747, %v749
  %v754 = vperm.slane %v696, 0
  %v756 = vadd.f32 %v751, %v754
  %v757 = vadd.f32 %v752, %v754
  %v758 = vpack.c.bf16 %v757, %v756
  %v759 = vld [vmem:[%s8] sm:$0xf]
  %v760 = vld [vmem:[%s8 + $0x4] sm:$0xf]
  %v761 = vld [vmem:[%s8 + $0x8] sm:$0xf]
  %v762 = vld [vmem:[%s8 + $0xc] sm:$0xf]
  %v763 = vld [vmem:[%s9] sm:$0x1]
  %v765 = vperm.slane %v763, 0
  %v771 = vunpack.c.l.b16 %v759
  %v772 = vunpack.c.l.b16 %v760
  %v773 = vunpack.c.l.b16 %v761
  %v774 = vunpack.c.l.b16 %v762
  %v775 = vpack.c.b16 %v772, %v771
  %v776 = vpack.c.b16 %v774, %v773
  %v780 = vsel %vm71, %v758, 0
  %782 = vmatpush.bf16.msra.mxu0 0
  %783 = vmatpush.bf16.msra.mxu0 0
  %784 = vmatpush.bf16.msra.mxu0 0
  %785 = vmatpush.bf16.msra.mxu0 0
  %786 = vmatpush.bf16.msra.mxu0 0
  %787 = vmatpush.bf16.msra.mxu0 0
  %788 = vmatpush.bf16.msra.mxu0 %v776
  %789 = vmatpush.bf16.msra.mxu0 %v775
  %790 = vmatmul.bf16.gmra.mxu0 %v780
  %v791 = vpop.f32.mrf.mxu0
  %v792 = vadd.f32 %v765, %v791
  %v793 = vpop.f32.mrf.mxu0
  %v794 = vadd.f32 %v765, %v793
  %795 = vdwg.mxu0
  %v796 = vmax.f32 %v792, 0.0
  %v797 = vmax.f32 %v794, 0.0
  %v798 = vpack.c.bf16 %v797, %v796
  %v799 = vld [vmem:[%s10] sm:$0xf]
  %v800 = vld [vmem:[%s10 + $0x4] sm:$0xf]
  %v801 = vld [vmem:[%s10 + $0x8] sm:$0xf]
  %v802 = vld [vmem:[%s10 + $0xc] sm:$0xf]
  %v803 = vld [vmem:[%s10 + $0x10] sm:$0xf]
  %v804 = vld [vmem:[%s10 + $0x14] sm:$0xf]
  %v805 = vld [vmem:[%s10 + $0x18] sm:$0xf]
  %v806 = vld [vmem:[%s10 + $0x1c] sm:$0xf]
  %v807 = vld [vmem:[%s11] sm:$0x1]
  %v809 = vperm.slane %v807, 0
  %v819 = vunpack.c.l.b16 %v799
  %v820 = vunpack.c.l.b16 %v800
  %v821 = vunpack.c.l.b16 %v801
  %v822 = vunpack.c.l.b16 %v802
  %v823 = vunpack.c.l.b16 %v803
  %v824 = vunpack.c.l.b16 %v804
  %v825 = vunpack.c.l.b16 %v805
  %v826 = vunpack.c.l.b16 %v806
  %v827 = vpack.c.b16 %v820, %v819
  %v828 = vpack.c.b16 %v822, %v821
  %v829 = vpack.c.b16 %v824, %v823
  %v830 = vpack.c.b16 %v826, %v825
  %vm835 = vcmask 523264
  %v837 = vsel %vm835, %v798, 0
  %839 = vmatpush.bf16.msra.mxu0 0
  %840 = vmatpush.bf16.msra.mxu0 0
  %841 = vmatpush.bf16.msra.mxu0 0
  %842 = vmatpush.bf16.msra.mxu0 0
  %843 = vmatpush.bf16.msra.mxu0 %v830
  %844 = vmatpush.bf16.msra.mxu0 %v829
  %845 = vmatpush.bf16.msra.mxu0 %v828
  %846 = vmatpush.bf16.msra.mxu0 %v827
  %847 = vmatmul.bf16.gmra.mxu0 %v837
  %v848 = vpop.f32.mrf.mxu0
  %v849 = vadd.f32 %v809, %v848
  %v850 = vpop.f32.mrf.mxu0
  %v851 = vadd.f32 %v809, %v850
  %852 = vdwg.mxu0
  %v853 = vld [vmem:[%s12] sm:$0x1]
  %v854 = vld [vmem:[%s13] sm:$0x1]
  %v855 = vsel %vm71, %v849, 0.0
  %856 = vadd.xlane.f32.xlu0 %v855
  %v857 = vpop.xlane.xlu0 %856
  %v858 = vsel %vm71, %v851, 0.0
  %859 = vadd.xlane.f32.xlu0 %v858
  %v860 = vpop.xlane.xlu0 %859
  %v861 = vmul.f32 %v857, %v709
  %v862 = vmul.f32 %v860, %v709
  %v863 = vsub.f32 %v849, %v861
  %v864 = vsub.f32 %v851, %v862
  %v865 = vmul.f32 %v863, %v863
  %v866 = vmul.f32 %v864, %v864
  %v867 = vsel %vm71, %v865, 0.0
  %868 = vadd.xlane.f32.xlu0 %v867
  %v869 = vpop.xlane.xlu0 %868
  %v870 = vsel %vm71, %v866, 0.0
  %871 = vadd.xlane.f32.xlu0 %v870
  %v872 = vpop.xlane.xlu0 %871
  %v873 = vmul.f32 %v869, %v709
  %v874 = vmul.f32 %v872, %v709
  %v875 = vadd.f32 %v873, 1e-12
  %v876 = vadd.f32 %v874, 1e-12
  %v877 = vrsqrt.pop %v875
  %v878 = vmul.f32 %v877, %v875
  %v879 = vmul.f32 %v878, %v877
  %v880 = vmul.f32 0.5, %v879
  %v881 = vsub.f32 1.5, %v880
  %v882 = vmul.f32 %v877, %v881
  %vm883 = vweird.f32 %v875
  %vm884 = vweird.f32 %v877
  %vm885 = vmor %vm883, %vm884
  %v886 = vsel %vm885, %v877, %v882
  %v887 = vrsqrt.pop %v876
  %v888 = vmul.f32 %v887, %v876
  %v889 = vmul.f32 %v888, %v887
  %v890 = vmul.f32 0.5, %v889
  %v891 = vsub.f32 1.5, %v890
  %v892 = vmul.f32 %v887, %v891
  %vm893 = vweird.f32 %v876
  %vm894 = vweird.f32 %v887
  %vm895 = vmor %vm893, %vm894
  %v896 = vsel %vm895, %v887, %v892
  %v897 = vmul.f32 %v863, %v886
  %v898 = vmul.f32 %v864, %v896
  %v900 = vperm.slane %v853, 0
  %v902 = vmul.f32 %v897, %v900
  %v903 = vmul.f32 %v898, %v900
  %v905 = vperm.slane %v854, 0
  %v907 = vadd.f32 %v902, %v905
  %v908 = vadd.f32 %v903, %v905
  %909 = vst.msk [vmem:[%s14] sm:$0xff] %vm71, %v907
  %910 = vst.msk [vmem:[%s14 + $0x8] sm:$0xff] %vm71, %v908
  // Predicated region
  $region58: #{fwd.2} parent=0 // pred_check
    _
  $region59: #{fwd.2} parent=0 // pred_check_branch
    %912 = sbr.rel (0) target = $region61
  $region60: #{fwd.2} parent=0 // pred_region
    _
  $region61: #{fwd.2} parent=0 // pred_fallthru
    _
  // Predicated region
  $region62: #{fwd.2} parent=0 // pred_check
    _
  $region63: #{fwd.2} parent=0 // pred_check_branch
    %914 = sbr.rel (0) target = $region65
  $region64: #{fwd.2} parent=0 // pred_region
    _
  $region65: #{fwd.2} parent=0 // pred_fallthru
    _

// kernel: fwd.3
$region0: #{fwd.3}
  #allocation0 [shape = 'u32[]', space=smem, size = 0x4, offset = 0x4, fixed_abs, tag = 'smem constant byte address 0x4 - core index']
  #allocation1 [shape = 'u32[72,128]{1,0:T(1,128)}', space=vmem, size = 0x9000, scoped, tag = 'internal scratch']
  #allocation2 [shape = 'f32[2,8,32]{2,1,0:T(8,128)}', space=vmem, size = 0x2000, scoped, tag = 'scratch operand']
  %s0 = inlined_call_operand.vmem [shape: f32[2,8,32], index: 0, kind: input, shape index: {}]
  %s1 = inlined_call_operand.vmem [shape: f32[2,1,8], index: 1, kind: input, shape index: {}]
  %s2 = inlined_call_operand.vmem [shape: bf16[32,96], index: 2, kind: input, shape index: {}]
  %s3 = inlined_call_operand.vmem [shape: f32[1,96], index: 3, kind: input, shape index: {}]
  %s4 = inlined_call_operand.vmem [shape: bf16[32,32], index: 4, kind: input, shape index: {}]
  %s5 = inlined_call_operand.vmem [shape: f32[1,32], index: 5, kind: input, shape index: {}]
  %s6 = inlined_call_operand.vmem [shape: f32[1,32], index: 6, kind: input, shape index: {}]
  %s7 = inlined_call_operand.vmem [shape: f32[1,32], index: 7, kind: input, shape index: {}]
  %s8 = inlined_call_operand.vmem [shape: bf16[32,64], index: 8, kind: input, shape index: {}]
  %s9 = inlined_call_operand.vmem [shape: f32[1,64], index: 9, kind: input, shape index: {}]
  %s10 = inlined_call_operand.vmem [shape: bf16[64,32], index: 10, kind: input, shape index: {}]
  %s11 = inlined_call_operand.vmem [shape: f32[1,32], index: 11, kind: input, shape index: {}]
  %s12 = inlined_call_operand.vmem [shape: f32[1,32], index: 12, kind: input, shape index: {}]
  %s13 = inlined_call_operand.vmem [shape: f32[1,32], index: 13, kind: input, shape index: {}]
  %s14 = inlined_call_operand.hbm [shape: f32[2,8,32], index: 14, kind: output, shape index: {}]
  %s15 = sld [smem:[#allocation0]]
  $region66: #{fwd.3} parent=0
    _
  %s17 = ssub.s32 1, %s15
  %s18 = scalar_select 0, %s17, %s15
  $region1: #{fwd.3} parent=0
    #allocation3 [shape = 'u8[8192]{0}', space=vmem, size = 0x2000, scoped, tag = 'output window, operand 0, single buffered']
    #allocation4 [shape = 's32[1]{0}', space=sflag, size = 0x4, scoped, tag = 'scoped memory for fwd.3']
    %19 = vsyncpa [#allocation4], 0
    // Predicated region
    $region2: #{fwd.3} parent=1 // pred_check
      _
    $region3: #{fwd.3} parent=1 // pred_check_branch
      %21 = sbr.rel (0) target = $region5
    $region4: #{fwd.3} parent=1 // pred_region
      _
    $region5: #{fwd.3} parent=1 // pred_fallthru
      _
    // Predicated region
    $region6: #{fwd.3} parent=1 // pred_check
      _
    $region7: #{fwd.3} parent=1 // pred_check_branch
      %23 = sbr.rel (0) target = $region9
    $region8: #{fwd.3} parent=1 // pred_region
      _
    $region9: #{fwd.3} parent=1 // pred_fallthru
      _
    // Predicated region
    $region10: #{fwd.3} parent=1 // pred_check
      _
    $region11: #{fwd.3} parent=1 // pred_check_branch
      %25 = sbr.rel (0) target = $region13
    $region12: #{fwd.3} parent=1 // pred_region
      _
    $region13: #{fwd.3} parent=1 // pred_fallthru
      _
    // Predicated region
    $region14: #{fwd.3} parent=1 // pred_check
      _
    $region15: #{fwd.3} parent=1 // pred_check_branch
      %27 = sbr.rel (0) target = $region17
    $region16: #{fwd.3} parent=1 // pred_region
      _
    $region17: #{fwd.3} parent=1 // pred_fallthru
      _
    // Predicated region
    $region18: #{fwd.3} parent=1 // pred_check
      _
    $region19: #{fwd.3} parent=1 // pred_check_branch
      %29 = sbr.rel (0) target = $region21
    $region20: #{fwd.3} parent=1 // pred_region
      _
    $region21: #{fwd.3} parent=1 // pred_fallthru
      _
    // Predicated region
    $region22: #{fwd.3} parent=1 // pred_check
      _
    $region23: #{fwd.3} parent=1 // pred_check_branch
      %31 = sbr.rel (0) target = $region25
    $region24: #{fwd.3} parent=1 // pred_region
      _
    $region25: #{fwd.3} parent=1 // pred_fallthru
      _
    // Predicated region
    $region26: #{fwd.3} parent=1 // pred_check
      _
    $region27: #{fwd.3} parent=1 // pred_check_branch
      %33 = sbr.rel (0) target = $region29
    $region28: #{fwd.3} parent=1 // pred_region
      _
    $region29: #{fwd.3} parent=1 // pred_fallthru
      _
    // Predicated region
    $region30: #{fwd.3} parent=1 // pred_check
      _
    $region31: #{fwd.3} parent=1 // pred_check_branch
      %35 = sbr.rel (0) target = $region33
    $region32: #{fwd.3} parent=1 // pred_region
      _
    $region33: #{fwd.3} parent=1 // pred_fallthru
      _
    // Predicated region
    $region34: #{fwd.3} parent=1 // pred_check
      _
    $region35: #{fwd.3} parent=1 // pred_check_branch
      %37 = sbr.rel (0) target = $region37
    $region36: #{fwd.3} parent=1 // pred_region
      _
    $region37: #{fwd.3} parent=1 // pred_fallthru
      _
    // Predicated region
    $region38: #{fwd.3} parent=1 // pred_check
      _
    $region39: #{fwd.3} parent=1 // pred_check_branch
      %39 = sbr.rel (0) target = $region41
    $region40: #{fwd.3} parent=1 // pred_region
      _
    $region41: #{fwd.3} parent=1 // pred_fallthru
      _
    // Predicated region
    $region42: #{fwd.3} parent=1 // pred_check
      _
    $region43: #{fwd.3} parent=1 // pred_check_branch
      %41 = sbr.rel (0) target = $region45
    $region44: #{fwd.3} parent=1 // pred_region
      _
    $region45: #{fwd.3} parent=1 // pred_fallthru
      _
    // Predicated region
    $region46: #{fwd.3} parent=1 // pred_check
      _
    $region47: #{fwd.3} parent=1 // pred_check_branch
      %43 = sbr.rel (0) target = $region49
    $region48: #{fwd.3} parent=1 // pred_region
      _
    $region49: #{fwd.3} parent=1 // pred_fallthru
      _
    // Predicated region
    $region50: #{fwd.3} parent=1 // pred_check
      _
    $region51: #{fwd.3} parent=1 // pred_check_branch
      %45 = sbr.rel (0) target = $region53
    $region52: #{fwd.3} parent=1 // pred_region
      _
    $region53: #{fwd.3} parent=1 // pred_fallthru
      _
    // Predicated region
    $region54: #{fwd.3} parent=1 // pred_check
      _
    $region55: #{fwd.3} parent=1 // pred_check_branch
      %47 = sbr.rel (0) target = $region57
    $region56: #{fwd.3} parent=1 // pred_region
      _
    $region57: #{fwd.3} parent=1 // pred_fallthru
      _
    %v49 = vld [vmem:[%s0] sm:$0xff]
    %v50 = vld [vmem:[%s0 + $0x8] sm:$0xff]
    %v51 = vpack.c.bf16 %v50, %v49
    %v52 = vld [vmem:[%s2] sm:$0xf]
    %v53 = vld [vmem:[%s2 + $0x4] sm:$0xf]
    %v54 = vld [vmem:[%s2 + $0x8] sm:$0xf]
    %v55 = vld [vmem:[%s2 + $0xc] sm:$0xf]
    %v56 = vld [vmem:[%s3] sm:$0x1]
    %v58 = vperm.slane %v56, 0
    %v64 = vunpack.c.l.b16 %v52
    %v65 = vunpack.c.l.b16 %v53
    %v66 = vunpack.c.l.b16 %v54
    %v67 = vunpack.c.l.b16 %v55
    %v68 = vpack.c.b16 %v65, %v64
    %v69 = vpack.c.b16 %v67, %v66
    %vm72 = vcmask 261120
    %v74 = vsel %vm72, %v51, 0
    %76 = vmatpush.bf16.msra.mxu0 0
    %77 = vmatpush.bf16.msra.mxu0 0
    %78 = vmatpush.bf16.msra.mxu0 0
    %79 = vmatpush.bf16.msra.mxu0 0
    %80 = vmatpush.bf16.msra.mxu0 0
    %81 = vmatpush.bf16.msra.mxu0 0
    %82 = vmatpush.bf16.msra.mxu0 %v69
    %83 = vmatpush.bf16.msra.mxu0 %v68
    %84 = vmatmul.bf16.gmra.mxu0 %v74
    %v85 = vpop.f32.mrf.mxu0
    %v86 = vadd.f32 %v58, %v85
    %v87 = vpop.f32.mrf.mxu0
    %v88 = vadd.f32 %v58, %v87
    %89 = vdwg.mxu0
    %v90 = vmul.f32 %v86, 0.35355338
    %v91 = vmul.f32 %v88, 0.35355338
    %v92 = vld [vmem:[%s1] sm:$0x1]
    %v93 = vld [vmem:[%s1 + $0x1] sm:$0x1]
    %v96 = vperm.slane %v92, 0
    %v97 = vperm.slane %v93, 0
    %101 = vrot.lane.b32.xlu0 %v86, 96
    %v102 = vpop.permute.xlu0 %101
    %vm103 = vcmask 64512
    %v105 = vsel %vm103, %v90, 0
    %v107 = vsel %vm103, %v102, 0
    %109 = vmatpush.xpose.msra.mxu0 0.0
    %110 = vmatpush.xpose.msra.mxu0 0.0
    %111 = vmatpush.xpose.msra.mxu0 0.0
    %112 = vmatpush.xpose.msra.mxu0 0.0
    %113 = vmatpush.xpose.msra.mxu0 0.0
    %114 = vmatpush.xpose.msra.mxu0 0.0
    %115 = vmatpush.xpose.msra.mxu0 0.0
    %116 = vmatpush.xpose.msra.mxu0 0.0
    %117 = vmatpush.xpose.msra.mxu0 0.0
    %118 = vmatpush.xpose.msra.mxu0 0.0
    %119 = vmatpush.xpose.msra.mxu0 0.0
    %120 = vmatpush.xpose.msra.mxu0 0.0
    %121 = vmatpush.xpose.msra.mxu0 0.0
    %122 = vmatpush.xpose.msra.mxu0 0.0
    %123 = vmatpush.xpose.msra.mxu0 0.0
    %124 = vmatpush.xpose.msra.mxu0 %v107
    %125 = vmatmul.f32.gmra.mxu0 %v105
    %v126 = vpop.f32.mrf.mxu0
    %v127 = vadd.f32 %v96, %v126
    %128 = vdwg.mxu0
    %130 = vrot.lane.b32.xlu0 %v88, 96
    %v131 = vpop.permute.xlu0 %130
    %v133 = vsel %vm103, %v91, 0
    %v135 = vsel %vm103, %v131, 0
    %137 = vmatpush.xpose.msra.mxu0 0.0
    %138 = vmatpush.xpose.msra.mxu0 0.0
    %139 = vmatpush.xpose.msra.mxu0 0.0
    %140 = vmatpush.xpose.msra.mxu0 0.0
    %141 = vmatpush.xpose.msra.mxu0 0.0
    %142 = vmatpush.xpose.msra.mxu0 0.0
    %143 = vmatpush.xpose.msra.mxu0 0.0
    %144 = vmatpush.xpose.msra.mxu0 0.0
    %145 = vmatpush.xpose.msra.mxu0 0.0
    %146 = vmatpush.xpose.msra.mxu0 0.0
    %147 = vmatpush.xpose.msra.mxu0 0.0
    %148 = vmatpush.xpose.msra.mxu0 0.0
    %149 = vmatpush.xpose.msra.mxu0 0.0
    %150 = vmatpush.xpose.msra.mxu0 0.0
    %151 = vmatpush.xpose.msra.mxu0 0.0
    %152 = vmatpush.xpose.msra.mxu0 %v135
    %153 = vmatmul.f32.gmra.mxu0 %v133
    %v154 = vpop.f32.mrf.mxu0
    %v155 = vadd.f32 %v97, %v154
    %156 = vdwg.mxu0
    %v157 = vsel %vm103, %v127, -inf
    %158 = vmax.xlane.f32.xlu0 %v157
    %v159 = vpop.xlane.xlu0 %158
    %v160 = vsel %vm103, %v155, -inf
    %161 = vmax.xlane.f32.xlu0 %v160
    %v162 = vpop.xlane.xlu0 %161
    %v163 = vsub.f32 %v127, %v159
    %v164 = vsub.f32 %v155, %v162
    %v165 = vmul.f32 %v163, 1.442695
    %v166 = vpow.pop %v165
    %v167 = vmul.f32 %v164, 1.442695
    %v168 = vpow.pop %v167
    %v169 = vsel %vm103, %v166, 0.0
    %170 = vadd.xlane.f32.xlu0 %v169
    %v171 = vpop.xlane.xlu0 %170
    %v172 = vsel %vm103, %v168, 0.0
    %173 = vadd.xlane.f32.xlu0 %v172
    %v174 = vpop.xlane.xlu0 %173
    %v175 = vrcp.pop %v171
    %v176 = vrcp.pop %v174
    %v177 = vmul.f32 %v166, %v175
    %v178 = vmul.f32 %v168, %v176
    %179 = vrot.lane.b32.xlu0 %v86, 64
    %v180 = vpop.permute.xlu0 %179
    %v183 = vsel %vm103, %v177, 0
    %185 = vmatpush.msra.mxu0 0.0
    %186 = vmatpush.msra.mxu0 0.0
    %187 = vmatpush.msra.mxu0 0.0
    %188 = vmatpush.msra.mxu0 0.0
    %189 = vmatpush.msra.mxu0 0.0
    %190 = vmatpush.msra.mxu0 0.0
    %191 = vmatpush.msra.mxu0 0.0
    %192 = vmatpush.msra.mxu0 0.0
    %193 = vmatpush.msra.mxu0 0.0
    %194 = vmatpush.msra.mxu0 0.0
    %195 = vmatpush.msra.mxu0 0.0
    %196 = vmatpush.msra.mxu0 0.0
    %197 = vmatpush.msra.mxu0 0.0
    %198 = vmatpush.msra.mxu0 0.0
    %199 = vmatpush.msra.mxu0 0.0
    %200 = vmatpush.msra.mxu0 %v180
    %201 = vmatmul.f32.gmra.mxu0 %v183
    %v202 = vpop.f32.mrf.mxu0
    %v203 = vadd.f32 0.0, %v202
    %204 = vdwg.mxu0
    %205 = vrot.lane.b32.xlu0 %v88, 64
    %v206 = vpop.permute.xlu0 %205
    %v209 = vsel %vm103, %v178, 0
    %211 = vmatpush.msra.mxu0 0.0
    %212 = vmatpush.msra.mxu0 0.0
    %213 = vmatpush.msra.mxu0 0.0
    %214 = vmatpush.msra.mxu0 0.0
    %215 = vmatpush.msra.mxu0 0.0
    %216 = vmatpush.msra.mxu0 0.0
    %217 = vmatpush.msra.mxu0 0.0
    %218 = vmatpush.msra.mxu0 0.0
    %219 = vmatpush.msra.mxu0 0.0
    %220 = vmatpush.msra.mxu0 0.0
    %221 = vmatpush.msra.mxu0 0.0
    %222 = vmatpush.msra.mxu0 0.0
    %223 = vmatpush.msra.mxu0 0.0
    %224 = vmatpush.msra.mxu0 0.0
    %225 = vmatpush.msra.mxu0 0.0
    %226 = vmatpush.msra.mxu0 %v206
    %227 = vmatmul.f32.gmra.mxu0 %v209
    %v228 = vpop.f32.mrf.mxu0
    %v229 = vadd.f32 0.0, %v228
    %230 = vdwg.mxu0
    %231 = vst.msk [vmem:[#allocation2] sm:$0xff] %vm103, %v203
    %232 = vst.msk [vmem:[#allocation2 + $0x8] sm:$0xff] %vm103, %v229
    %233 = vrot.lane.b32.xlu0 %v90, 120
    %v234 = vpop.permute.xlu0 %233
    %235 = vrot.lane.b32.xlu0 %v86, 88
    %v236 = vpop.permute.xlu0 %235
    %v237 = vsel %vm103, %v234, 0
    %v239 = vsel %vm103, %v236, 0
    %241 = vmatpush.xpose.msra.mxu0 0.0
    %242 = vmatpush.xpose.msra.mxu0 0.0
    %243 = vmatpush.xpose.msra.mxu0 0.0
    %244 = vmatpush.xpose.msra.mxu0 0.0
    %245 = vmatpush.xpose.msra.mxu0 0.0
    %246 = vmatpush.xpose.msra.mxu0 0.0
    %247 = vmatpush.xpose.msra.mxu0 0.0
    %248 = vmatpush.xpose.msra.mxu0 0.0
    %249 = vmatpush.xpose.msra.mxu0 0.0
    %250 = vmatpush.xpose.msra.mxu0 0.0
    %251 = vmatpush.xpose.msra.mxu0 0.0
    %252 = vmatpush.xpose.msra.mxu0 0.0
    %253 = vmatpush.xpose.msra.mxu0 0.0
    %254 = vmatpush.xpose.msra.mxu0 0.0
    %255 = vmatpush.xpose.msra.mxu0 0.0
    %256 = vmatpush.xpose.msra.mxu0 %v239
    %257 = vmatmul.f32.gmra.mxu0 %v237
    %v258 = vpop.f32.mrf.mxu0
    %v259 = vadd.f32 %v96, %v258
    %260 = vdwg.mxu0
    %261 = vrot.lane.b32.xlu0 %v91, 120
    %v262 = vpop.permute.xlu0 %261
    %263 = vrot.lane.b32.xlu0 %v88, 88
    %v264 = vpop.permute.xlu0 %263
    %v265 = vsel %vm103, %v262, 0
    %v267 = vsel %vm103, %v264, 0
    %269 = vmatpush.xpose.msra.mxu0 0.0
    %270 = vmatpush.xpose.msra.mxu0 0.0
    %271 = vmatpush.xpose.msra.mxu0 0.0
    %272 = vmatpush.xpose.msra.mxu0 0.0
    %273 = vmatpush.xpose.msra.mxu0 0.0
    %274 = vmatpush.xpose.msra.mxu0 0.0
    %275 = vmatpush.xpose.msra.mxu0 0.0
    %276 = vmatpush.xpose.msra.mxu0 0.0
    %277 = vmatpush.xpose.msra.mxu0 0.0
    %278 = vmatpush.xpose.msra.mxu0 0.0
    %279 = vmatpush.xpose.msra.mxu0 0.0
    %280 = vmatpush.xpose.msra.mxu0 0.0
    %281 = vmatpush.xpose.msra.mxu0 0.0
    %282 = vmatpush.xpose.msra.mxu0 0.0
    %283 = vmatpush.xpose.msra.mxu0 0.0
    %284 = vmatpush.xpose.msra.mxu0 %v267
    %285 = vmatmul.f32.gmra.mxu0 %v265
    %v286 = vpop.f32.mrf.mxu0
    %v287 = vadd.f32 %v97, %v286
    %288 = vdwg.mxu0
    %v289 = vsel %vm103, %v259, -inf
    %290 = vmax.xlane.f32.xlu0 %v289
    %v291 = vpop.xlane.xlu0 %290
    %v292 = vsel %vm103, %v287, -inf
    %293 = vmax.xlane.f32.xlu0 %v292
    %v294 = vpop.xlane.xlu0 %293
    %v295 = vsub.f32 %v259, %v291
    %v296 = vsub.f32 %v287, %v294
    %v297 = vmul.f32 %v295, 1.442695
    %v298 = vpow.pop %v297
    %v299 = vmul.f32 %v296, 1.442695
    %v300 = vpow.pop %v299
    %v301 = vsel %vm103, %v298, 0.0
    %302 = vadd.xlane.f32.xlu0 %v301
    %v303 = vpop.xlane.xlu0 %302
    %v304 = vsel %vm103, %v300, 0.0
    %305 = vadd.xlane.f32.xlu0 %v304
    %v306 = vpop.xlane.xlu0 %305
    %v307 = vrcp.pop %v303
    %v308 = vrcp.pop %v306
    %v309 = vmul.f32 %v298, %v307
    %v310 = vmul.f32 %v300, %v308
    %311 = vrot.lane.b32.xlu0 %v86, 56
    %v312 = vpop.permute.xlu0 %311
    %v315 = vsel %vm103, %v309, 0
    %317 = vmatpush.msra.mxu0 0.0
    %318 = vmatpush.msra.mxu0 0.0
    %319 = vmatpush.msra.mxu0 0.0
    %320 = vmatpush.msra.mxu0 0.0
    %321 = vmatpush.msra.mxu0 0.0
    %322 = vmatpush.msra.mxu0 0.0
    %323 = vmatpush.msra.mxu0 0.0
    %324 = vmatpush.msra.mxu0 0.0
    %325 = vmatpush.msra.mxu0 0.0
    %326 = vmatpush.msra.mxu0 0.0
    %327 = vmatpush.msra.mxu0 0.0
    %328 = vmatpush.msra.mxu0 0.0
    %329 = vmatpush.msra.mxu0 0.0
    %330 = vmatpush.msra.mxu0 0.0
    %331 = vmatpush.msra.mxu0 0.0
    %332 = vmatpush.msra.mxu0 %v312
    %333 = vmatmul.f32.gmra.mxu0 %v315
    %v334 = vpop.f32.mrf.mxu0
    %v335 = vadd.f32 0.0, %v334
    %336 = vdwg.mxu0
    %337 = vrot.lane.b32.xlu0 %v88, 56
    %v338 = vpop.permute.xlu0 %337
    %v341 = vsel %vm103, %v310, 0
    %343 = vmatpush.msra.mxu0 0.0
    %344 = vmatpush.msra.mxu0 0.0
    %345 = vmatpush.msra.mxu0 0.0
    %346 = vmatpush.msra.mxu0 0.0
    %347 = vmatpush.msra.mxu0 0.0
    %348 = vmatpush.msra.mxu0 0.0
    %349 = vmatpush.msra.mxu0 0.0
    %350 = vmatpush.msra.mxu0 0.0
    %351 = vmatpush.msra.mxu0 0.0
    %352 = vmatpush.msra.mxu0 0.0
    %353 = vmatpush.msra.mxu0 0.0
    %354 = vmatpush.msra.mxu0 0.0
    %355 = vmatpush.msra.mxu0 0.0
    %356 = vmatpush.msra.mxu0 0.0
    %357 = vmatpush.msra.mxu0 0.0
    %358 = vmatpush.msra.mxu0 %v338
    %359 = vmatmul.f32.gmra.mxu0 %v341
    %v360 = vpop.f32.mrf.mxu0
    %v361 = vadd.f32 0.0, %v360
    %362 = vdwg.mxu0
    %365 = vrot.lane.b32.xlu0 %v335, 8
    %v366 = vpop.permute.xlu0 %365
    %367 = vrot.lane.b32.xlu0 %v361, 8
    %v368 = vpop.permute.xlu0 %367
    %vm371 = vcmask 130112
    %372 = vst.msk [vmem:[#allocation2] sm:$0xff] %vm371, %v366
    %373 = vst.msk [vmem:[#allocation2 + $0x8] sm:$0xff] %vm371, %v368
    %374 = vrot.lane.b32.xlu0 %v90, 112
    %v375 = vpop.permute.xlu0 %374
    %376 = vrot.lane.b32.xlu0 %v86, 80
    %v377 = vpop.permute.xlu0 %376
    %v378 = vsel %vm103, %v375, 0
    %v380 = vsel %vm103, %v377, 0
    %382 = vmatpush.xpose.msra.mxu0 0.0
    %383 = vmatpush.xpose.msra.mxu0 0.0
    %384 = vmatpush.xpose.msra.mxu0 0.0
    %385 = vmatpush.xpose.msra.mxu0 0.0
    %386 = vmatpush.xpose.msra.mxu0 0.0
    %387 = vmatpush.xpose.msra.mxu0 0.0
    %388 = vmatpush.xpose.msra.mxu0 0.0
    %389 = vmatpush.xpose.msra.mxu0 0.0
    %390 = vmatpush.xpose.msra.mxu0 0.0
    %391 = vmatpush.xpose.msra.mxu0 0.0
    %392 = vmatpush.xpose.msra.mxu0 0.0
    %393 = vmatpush.xpose.msra.mxu0 0.0
    %394 = vmatpush.xpose.msra.mxu0 0.0
    %395 = vmatpush.xpose.msra.mxu0 0.0
    %396 = vmatpush.xpose.msra.mxu0 0.0
    %397 = vmatpush.xpose.msra.mxu0 %v380
    %398 = vmatmul.f32.gmra.mxu0 %v378
    %v399 = vpop.f32.mrf.mxu0
    %v400 = vadd.f32 %v96, %v399
    %401 = vdwg.mxu0
    %402 = vrot.lane.b32.xlu0 %v91, 112
    %v403 = vpop.permute.xlu0 %402
    %404 = vrot.lane.b32.xlu0 %v88, 80
    %v405 = vpop.permute.xlu0 %404
    %v406 = vsel %vm103, %v403, 0
    %v408 = vsel %vm103, %v405, 0
    %410 = vmatpush.xpose.msra.mxu0 0.0
    %411 = vmatpush.xpose.msra.mxu0 0.0
    %412 = vmatpush.xpose.msra.mxu0 0.0
    %413 = vmatpush.xpose.msra.mxu0 0.0
    %414 = vmatpush.xpose.msra.mxu0 0.0
    %415 = vmatpush.xpose.msra.mxu0 0.0
    %416 = vmatpush.xpose.msra.mxu0 0.0
    %417 = vmatpush.xpose.msra.mxu0 0.0
    %418 = vmatpush.xpose.msra.mxu0 0.0
    %419 = vmatpush.xpose.msra.mxu0 0.0
    %420 = vmatpush.xpose.msra.mxu0 0.0
    %421 = vmatpush.xpose.msra.mxu0 0.0
    %422 = vmatpush.xpose.msra.mxu0 0.0
    %423 = vmatpush.xpose.msra.mxu0 0.0
    %424 = vmatpush.xpose.msra.mxu0 0.0
    %425 = vmatpush.xpose.msra.mxu0 %v408
    %426 = vmatmul.f32.gmra.mxu0 %v406
    %v427 = vpop.f32.mrf.mxu0
    %v428 = vadd.f32 %v97, %v427
    %429 = vdwg.mxu0
    %v430 = vsel %vm103, %v400, -inf
    %431 = vmax.xlane.f32.xlu0 %v430
    %v432 = vpop.xlane.xlu0 %431
    %v433 = vsel %vm103, %v428, -inf
    %434 = vmax.xlane.f32.xlu0 %v433
    %v435 = vpop.xlane.xlu0 %434
    %v436 = vsub.f32 %v400, %v432
    %v437 = vsub.f32 %v428, %v435
    %v438 = vmul.f32 %v436, 1.442695
    %v439 = vpow.pop %v438
    %v440 = vmul.f32 %v437, 1.442695
    %v441 = vpow.pop %v440
    %v442 = vsel %vm103, %v439, 0.0
    %443 = vadd.xlane.f32.xlu0 %v442
    %v444 = vpop.xlane.xlu0 %443
    %v445 = vsel %vm103, %v441, 0.0
    %446 = vadd.xlane.f32.xlu0 %v445
    %v447 = vpop.xlane.xlu0 %446
    %v448 = vrcp.pop %v444
    %v449 = vrcp.pop %v447
    %v450 = vmul.f32 %v439, %v448
    %v451 = vmul.f32 %v441, %v449
    %452 = vrot.lane.b32.xlu0 %v86, 48
    %v453 = vpop.permute.xlu0 %452
    %v456 = vsel %vm103, %v450, 0
    %458 = vmatpush.msra.mxu0 0.0
    %459 = vmatpush.msra.mxu0 0.0
    %460 = vmatpush.msra.mxu0 0.0
    %461 = vmatpush.msra.mxu0 0.0
    %462 = vmatpush.msra.mxu0 0.0
    %463 = vmatpush.msra.mxu0 0.0
    %464 = vmatpush.msra.mxu0 0.0
    %465 = vmatpush.msra.mxu0 0.0
    %466 = vmatpush.msra.mxu0 0.0
    %467 = vmatpush.msra.mxu0 0.0
    %468 = vmatpush.msra.mxu0 0.0
    %469 = vmatpush.msra.mxu0 0.0
    %470 = vmatpush.msra.mxu0 0.0
    %471 = vmatpush.msra.mxu0 0.0
    %472 = vmatpush.msra.mxu0 0.0
    %473 = vmatpush.msra.mxu0 %v453
    %474 = vmatmul.f32.gmra.mxu0 %v456
    %v475 = vpop.f32.mrf.mxu0
    %v476 = vadd.f32 0.0, %v475
    %477 = vdwg.mxu0
    %478 = vrot.lane.b32.xlu0 %v88, 48
    %v479 = vpop.permute.xlu0 %478
    %v482 = vsel %vm103, %v451, 0
    %484 = vmatpush.msra.mxu0 0.0
    %485 = vmatpush.msra.mxu0 0.0
    %486 = vmatpush.msra.mxu0 0.0
    %487 = vmatpush.msra.mxu0 0.0
    %488 = vmatpush.msra.mxu0 0.0
    %489 = vmatpush.msra.mxu0 0.0
    %490 = vmatpush.msra.mxu0 0.0
    %491 = vmatpush.msra.mxu0 0.0
    %492 = vmatpush.msra.mxu0 0.0
    %493 = vmatpush.msra.mxu0 0.0
    %494 = vmatpush.msra.mxu0 0.0
    %495 = vmatpush.msra.mxu0 0.0
    %496 = vmatpush.msra.mxu0 0.0
    %497 = vmatpush.msra.mxu0 0.0
    %498 = vmatpush.msra.mxu0 0.0
    %499 = vmatpush.msra.mxu0 %v479
    %500 = vmatmul.f32.gmra.mxu0 %v482
    %v501 = vpop.f32.mrf.mxu0
    %v502 = vadd.f32 0.0, %v501
    %503 = vdwg.mxu0
    %506 = vrot.lane.b32.xlu0 %v476, 16
    %v507 = vpop.permute.xlu0 %506
    %508 = vrot.lane.b32.xlu0 %v502, 16
    %v509 = vpop.permute.xlu0 %508
    %vm512 = vcmask 195712
    %513 = vst.msk [vmem:[#allocation2] sm:$0xff] %vm512, %v507
    %514 = vst.msk [vmem:[#allocation2 + $0x8] sm:$0xff] %vm512, %v509
    %515 = vrot.lane.b32.xlu0 %v90, 104
    %v516 = vpop.permute.xlu0 %515
    %517 = vrot.lane.b32.xlu0 %v86, 72
    %v518 = vpop.permute.xlu0 %517
    %v519 = vsel %vm103, %v516, 0
    %v521 = vsel %vm103, %v518, 0
    %523 = vmatpush.xpose.msra.mxu0 0.0
    %524 = vmatpush.xpose.msra.mxu0 0.0
    %525 = vmatpush.xpose.msra.mxu0 0.0
    %526 = vmatpush.xpose.msra.mxu0 0.0
    %527 = vmatpush.xpose.msra.mxu0 0.0
    %528 = vmatpush.xpose.msra.mxu0 0.0
    %529 = vmatpush.xpose.msra.mxu0 0.0
    %530 = vmatpush.xpose.msra.mxu0 0.0
    %531 = vmatpush.xpose.msra.mxu0 0.0
    %532 = vmatpush.xpose.msra.mxu0 0.0
    %533 = vmatpush.xpose.msra.mxu0 0.0
    %534 = vmatpush.xpose.msra.mxu0 0.0
    %535 = vmatpush.xpose.msra.mxu0 0.0
    %536 = vmatpush.xpose.msra.mxu0 0.0
    %537 = vmatpush.xpose.msra.mxu0 0.0
    %538 = vmatpush.xpose.msra.mxu0 %v521
    %539 = vmatmul.f32.gmra.mxu0 %v519
    %v540 = vpop.f32.mrf.mxu0
    %v541 = vadd.f32 %v96, %v540
    %542 = vdwg.mxu0
    %543 = vrot.lane.b32.xlu0 %v91, 104
    %v544 = vpop.permute.xlu0 %543
    %545 = vrot.lane.b32.xlu0 %v88, 72
    %v546 = vpop.permute.xlu0 %545
    %v547 = vsel %vm103, %v544, 0
    %v549 = vsel %vm103, %v546, 0
    %551 = vmatpush.xpose.msra.mxu0 0.0
    %552 = vmatpush.xpose.msra.mxu0 0.0
    %553 = vmatpush.xpose.msra.mxu0 0.0
    %554 = vmatpush.xpose.msra.mxu0 0.0
    %555 = vmatpush.xpose.msra.mxu0 0.0
    %556 = vmatpush.xpose.msra.mxu0 0.0
    %557 = vmatpush.xpose.msra.mxu0 0.0
    %558 = vmatpush.xpose.msra.mxu0 0.0
    %559 = vmatpush.xpose.msra.mxu0 0.0
    %560 = vmatpush.xpose.msra.mxu0 0.0
    %561 = vmatpush.xpose.msra.mxu0 0.0
    %562 = vmatpush.xpose.msra.mxu0 0.0
    %563 = vmatpush.xpose.msra.mxu0 0.0
    %564 = vmatpush.xpose.msra.mxu0 0.0
    %565 = vmatpush.xpose.msra.mxu0 0.0
    %566 = vmatpush.xpose.msra.mxu0 %v549
    %567 = vmatmul.f32.gmra.mxu0 %v547
    %v568 = vpop.f32.mrf.mxu0
    %v569 = vadd.f32 %v97, %v568
    %570 = vdwg.mxu0
    %v571 = vsel %vm103, %v541, -inf
    %572 = vmax.xlane.f32.xlu0 %v571
    %v573 = vpop.xlane.xlu0 %572
    %v574 = vsel %vm103, %v569, -inf
    %575 = vmax.xlane.f32.xlu0 %v574
    %v576 = vpop.xlane.xlu0 %575
    %v577 = vsub.f32 %v541, %v573
    %v578 = vsub.f32 %v569, %v576
    %v579 = vmul.f32 %v577, 1.442695
    %v580 = vpow.pop %v579
    %v581 = vmul.f32 %v578, 1.442695
    %v582 = vpow.pop %v581
    %v583 = vsel %vm103, %v580, 0.0
    %584 = vadd.xlane.f32.xlu0 %v583
    %v585 = vpop.xlane.xlu0 %584
    %v586 = vsel %vm103, %v582, 0.0
    %587 = vadd.xlane.f32.xlu0 %v586
    %v588 = vpop.xlane.xlu0 %587
    %v589 = vrcp.pop %v585
    %v590 = vrcp.pop %v588
    %v591 = vmul.f32 %v580, %v589
    %v592 = vmul.f32 %v582, %v590
    %593 = vrot.lane.b32.xlu0 %v86, 40
    %v594 = vpop.permute.xlu0 %593
    %v597 = vsel %vm103, %v591, 0
    %599 = vmatpush.msra.mxu0 0.0
    %600 = vmatpush.msra.mxu0 0.0
    %601 = vmatpush.msra.mxu0 0.0
    %602 = vmatpush.msra.mxu0 0.0
    %603 = vmatpush.msra.mxu0 0.0
    %604 = vmatpush.msra.mxu0 0.0
    %605 = vmatpush.msra.mxu0 0.0
    %606 = vmatpush.msra.mxu0 0.0
    %607 = vmatpush.msra.mxu0 0.0
    %608 = vmatpush.msra.mxu0 0.0
    %609 = vmatpush.msra.mxu0 0.0
    %610 = vmatpush.msra.mxu0 0.0
    %611 = vmatpush.msra.mxu0 0.0
    %612 = vmatpush.msra.mxu0 0.0
    %613 = vmatpush.msra.mxu0 0.0
    %614 = vmatpush.msra.mxu0 %v594
    %615 = vmatmul.f32.gmra.mxu0 %v597
    %v616 = vpop.f32.mrf.mxu0
    %v617 = vadd.f32 0.0, %v616
    %618 = vdwg.mxu0
    %619 = vrot.lane.b32.xlu0 %v88, 40
    %v620 = vpop.permute.xlu0 %619
    %v623 = vsel %vm103, %v592, 0
    %625 = vmatpush.msra.mxu0 0.0
    %626 = vmatpush.msra.mxu0 0.0
    %627 = vmatpush.msra.mxu0 0.0
    %628 = vmatpush.msra.mxu0 0.0
    %629 = vmatpush.msra.mxu0 0.0
    %630 = vmatpush.msra.mxu0 0.0
    %631 = vmatpush.msra.mxu0 0.0
    %632 = vmatpush.msra.mxu0 0.0
    %633 = vmatpush.msra.mxu0 0.0
    %634 = vmatpush.msra.mxu0 0.0
    %635 = vmatpush.msra.mxu0 0.0
    %636 = vmatpush.msra.mxu0 0.0
    %637 = vmatpush.msra.mxu0 0.0
    %638 = vmatpush.msra.mxu0 0.0
    %639 = vmatpush.msra.mxu0 0.0
    %640 = vmatpush.msra.mxu0 %v620
    %641 = vmatmul.f32.gmra.mxu0 %v623
    %v642 = vpop.f32.mrf.mxu0
    %v643 = vadd.f32 0.0, %v642
    %644 = vdwg.mxu0
    %647 = vrot.lane.b32.xlu0 %v617, 24
    %v648 = vpop.permute.xlu0 %647
    %649 = vrot.lane.b32.xlu0 %v643, 24
    %v650 = vpop.permute.xlu0 %649
    %vm653 = vcmask 261312
    %654 = vst.msk [vmem:[#allocation2] sm:$0xff] %vm653, %v648
    %655 = vst.msk [vmem:[#allocation2 + $0x8] sm:$0xff] %vm653, %v650
    %v656 = vld [vmem:[#allocation2] sm:$0xff]
    %v657 = vld [vmem:[#allocation2 + $0x8] sm:$0xff]
    %v658 = vpack.c.bf16 %v657, %v656
    %v659 = vld [vmem:[%s4] sm:$0xf]
    %v660 = vld [vmem:[%s4 + $0x4] sm:$0xf]
    %v661 = vld [vmem:[%s4 + $0x8] sm:$0xf]
    %v662 = vld [vmem:[%s4 + $0xc] sm:$0xf]
    %v663 = vld [vmem:[%s5] sm:$0x1]
    %v665 = vperm.slane %v663, 0
    %v671 = vunpack.c.l.b16 %v659
    %v672 = vunpack.c.l.b16 %v660
    %v673 = vunpack.c.l.b16 %v661
    %v674 = vunpack.c.l.b16 %v662
    %v675 = vpack.c.b16 %v672, %v671
    %v676 = vpack.c.b16 %v674, %v673
    %v680 = vsel %vm72, %v658, 0
    %682 = vmatpush.bf16.msra.mxu0 0
    %683 = vmatpush.bf16.msra.mxu0 0
    %684 = vmatpush.bf16.msra.mxu0 0
    %685 = vmatpush.bf16.msra.mxu0 0
    %686 = vmatpush.bf16.msra.mxu0 0
    %687 = vmatpush.bf16.msra.mxu0 0
    %688 = vmatpush.bf16.msra.mxu0 %v676
    %689 = vmatpush.bf16.msra.mxu0 %v675
    %690 = vmatmul.bf16.gmra.mxu0 %v680
    %v691 = vpop.f32.mrf.mxu0
    %v692 = vadd.f32 %v665, %v691
    %v693 = vpop.f32.mrf.mxu0
    %v694 = vadd.f32 %v665, %v693
    %695 = vdwg.mxu0
    %v696 = vld [vmem:[%s6] sm:$0x1]
    %v697 = vld [vmem:[%s7] sm:$0x1]
    %v698 = vsel %vm72, %v692, 0.0
    %699 = vadd.xlane.f32.xlu0 %v698
    %v700 = vpop.xlane.xlu0 %699
    %v701 = vsel %vm72, %v694, 0.0
    %702 = vadd.xlane.f32.xlu0 %v701
    %v703 = vpop.xlane.xlu0 %702
    %v704 = vrcp.pop 32.0
    %v705 = vmul.f32 32.0, %v704
    %v706 = vsub.f32 1.0, %v705
    %v707 = vmul.f32 %v704, %v706
    %v708 = vadd.f32 %v704, %v707
    %vm709 = vweird.f32 %v704
    %v710 = vsel %vm709, %v704, %v708
    %v711 = vmul.f32 %v700, %v710
    %v712 = vmul.f32 %v703, %v710
    %v713 = vsub.f32 %v692, %v711
    %v714 = vsub.f32 %v694, %v712
    %v715 = vmul.f32 %v713, %v713
    %v716 = vmul.f32 %v714, %v714
    %v717 = vsel %vm72, %v715, 0.0
    %718 = vadd.xlane.f32.xlu0 %v717
    %v719 = vpop.xlane.xlu0 %718
    %v720 = vsel %vm72, %v716, 0.0
    %721 = vadd.xlane.f32.xlu0 %v720
    %v722 = vpop.xlane.xlu0 %721
    %v723 = vmul.f32 %v719, %v710
    %v724 = vmul.f32 %v722, %v710
    %v725 = vadd.f32 %v723, 1e-12
    %v726 = vadd.f32 %v724, 1e-12
    %v727 = vrsqrt.pop %v725
    %v728 = vmul.f32 %v727, %v725
    %v729 = vmul.f32 %v728, %v727
    %v730 = vmul.f32 0.5, %v729
    %v731 = vsub.f32 1.5, %v730
    %v732 = vmul.f32 %v727, %v731
    %vm733 = vweird.f32 %v725
    %vm734 = vweird.f32 %v727
    %vm735 = vmor %vm733, %vm734
    %v736 = vsel %vm735, %v727, %v732
    %v737 = vrsqrt.pop %v726
    %v738 = vmul.f32 %v737, %v726
    %v739 = vmul.f32 %v738, %v737
    %v740 = vmul.f32 0.5, %v739
    %v741 = vsub.f32 1.5, %v740
    %v742 = vmul.f32 %v737, %v741
    %vm743 = vweird.f32 %v726
    %vm744 = vweird.f32 %v737
    %vm745 = vmor %vm743, %vm744
    %v746 = vsel %vm745, %v737, %v742
    %v747 = vmul.f32 %v713, %v736
    %v748 = vmul.f32 %v714, %v746
    %v750 = vperm.slane %v696, 0
    %v752 = vmul.f32 %v747, %v750
    %v753 = vmul.f32 %v748, %v750
    %v755 = vperm.slane %v697, 0
    %v757 = vadd.f32 %v752, %v755
    %v758 = vadd.f32 %v753, %v755
    %v759 = vpack.c.bf16 %v758, %v757
    %v760 = vld [vmem:[%s8] sm:$0xf]
    %v761 = vld [vmem:[%s8 + $0x4] sm:$0xf]
    %v762 = vld [vmem:[%s8 + $0x8] sm:$0xf]
    %v763 = vld [vmem:[%s8 + $0xc] sm:$0xf]
    %v764 = vld [vmem:[%s9] sm:$0x1]
    %v766 = vperm.slane %v764, 0
    %v772 = vunpack.c.l.b16 %v760
    %v773 = vunpack.c.l.b16 %v761
    %v774 = vunpack.c.l.b16 %v762
    %v775 = vunpack.c.l.b16 %v763
    %v776 = vpack.c.b16 %v773, %v772
    %v777 = vpack.c.b16 %v775, %v774
    %v781 = vsel %vm72, %v759, 0
    %783 = vmatpush.bf16.msra.mxu0 0
    %784 = vmatpush.bf16.msra.mxu0 0
    %785 = vmatpush.bf16.msra.mxu0 0
    %786 = vmatpush.bf16.msra.mxu0 0
    %787 = vmatpush.bf16.msra.mxu0 0
    %788 = vmatpush.bf16.msra.mxu0 0
    %789 = vmatpush.bf16.msra.mxu0 %v777
    %790 = vmatpush.bf16.msra.mxu0 %v776
    %791 = vmatmul.bf16.gmra.mxu0 %v781
    %v792 = vpop.f32.mrf.mxu0
    %v793 = vadd.f32 %v766, %v792
    %v794 = vpop.f32.mrf.mxu0
    %v795 = vadd.f32 %v766, %v794
    %796 = vdwg.mxu0
    %v797 = vmax.f32 %v793, 0.0
    %v798 = vmax.f32 %v795, 0.0
    %v799 = vpack.c.bf16 %v798, %v797
    %v800 = vld [vmem:[%s10] sm:$0xf]
    %v801 = vld [vmem:[%s10 + $0x4] sm:$0xf]
    %v802 = vld [vmem:[%s10 + $0x8] sm:$0xf]
    %v803 = vld [vmem:[%s10 + $0xc] sm:$0xf]
    %v804 = vld [vmem:[%s10 + $0x10] sm:$0xf]
    %v805 = vld [vmem:[%s10 + $0x14] sm:$0xf]
    %v806 = vld [vmem:[%s10 + $0x18] sm:$0xf]
    %v807 = vld [vmem:[%s10 + $0x1c] sm:$0xf]
    %v808 = vld [vmem:[%s11] sm:$0x1]
    %v810 = vperm.slane %v808, 0
    %v820 = vunpack.c.l.b16 %v800
    %v821 = vunpack.c.l.b16 %v801
    %v822 = vunpack.c.l.b16 %v802
    %v823 = vunpack.c.l.b16 %v803
    %v824 = vunpack.c.l.b16 %v804
    %v825 = vunpack.c.l.b16 %v805
    %v826 = vunpack.c.l.b16 %v806
    %v827 = vunpack.c.l.b16 %v807
    %v828 = vpack.c.b16 %v821, %v820
    %v829 = vpack.c.b16 %v823, %v822
    %v830 = vpack.c.b16 %v825, %v824
    %v831 = vpack.c.b16 %v827, %v826
    %vm836 = vcmask 523264
    %v838 = vsel %vm836, %v799, 0
    %840 = vmatpush.bf16.msra.mxu0 0
    %841 = vmatpush.bf16.msra.mxu0 0
    %842 = vmatpush.bf16.msra.mxu0 0
    %843 = vmatpush.bf16.msra.mxu0 0
    %844 = vmatpush.bf16.msra.mxu0 %v831
    %845 = vmatpush.bf16.msra.mxu0 %v830
    %846 = vmatpush.bf16.msra.mxu0 %v829
    %847 = vmatpush.bf16.msra.mxu0 %v828
    %848 = vmatmul.bf16.gmra.mxu0 %v838
    %v849 = vpop.f32.mrf.mxu0
    %v850 = vadd.f32 %v810, %v849
    %v851 = vpop.f32.mrf.mxu0
    %v852 = vadd.f32 %v810, %v851
    %853 = vdwg.mxu0
    %v854 = vld [vmem:[%s12] sm:$0x1]
    %v855 = vld [vmem:[%s13] sm:$0x1]
    %v856 = vsel %vm72, %v850, 0.0
    %857 = vadd.xlane.f32.xlu0 %v856
    %v858 = vpop.xlane.xlu0 %857
    %v859 = vsel %vm72, %v852, 0.0
    %860 = vadd.xlane.f32.xlu0 %v859
    %v861 = vpop.xlane.xlu0 %860
    %v862 = vmul.f32 %v858, %v710
    %v863 = vmul.f32 %v861, %v710
    %v864 = vsub.f32 %v850, %v862
    %v865 = vsub.f32 %v852, %v863
    %v866 = vmul.f32 %v864, %v864
    %v867 = vmul.f32 %v865, %v865
    %v868 = vsel %vm72, %v866, 0.0
    %869 = vadd.xlane.f32.xlu0 %v868
    %v870 = vpop.xlane.xlu0 %869
    %v871 = vsel %vm72, %v867, 0.0
    %872 = vadd.xlane.f32.xlu0 %v871
    %v873 = vpop.xlane.xlu0 %872
    %v874 = vmul.f32 %v870, %v710
    %v875 = vmul.f32 %v873, %v710
    %v876 = vadd.f32 %v874, 1e-12
    %v877 = vadd.f32 %v875, 1e-12
    %v878 = vrsqrt.pop %v876
    %v879 = vmul.f32 %v878, %v876
    %v880 = vmul.f32 %v879, %v878
    %v881 = vmul.f32 0.5, %v880
    %v882 = vsub.f32 1.5, %v881
    %v883 = vmul.f32 %v878, %v882
    %vm884 = vweird.f32 %v876
    %vm885 = vweird.f32 %v878
    %vm886 = vmor %vm884, %vm885
    %v887 = vsel %vm886, %v878, %v883
    %v888 = vrsqrt.pop %v877
    %v889 = vmul.f32 %v888, %v877
    %v890 = vmul.f32 %v889, %v888
    %v891 = vmul.f32 0.5, %v890
    %v892 = vsub.f32 1.5, %v891
    %v893 = vmul.f32 %v888, %v892
    %vm894 = vweird.f32 %v877
    %vm895 = vweird.f32 %v888
    %vm896 = vmor %vm894, %vm895
    %v897 = vsel %vm896, %v888, %v893
    %v898 = vmul.f32 %v864, %v887
    %v899 = vmul.f32 %v865, %v897
    %v901 = vperm.slane %v854, 0
    %v903 = vmul.f32 %v898, %v901
    %v904 = vmul.f32 %v899, %v901
    %v906 = vperm.slane %v855, 0
    %v908 = vadd.f32 %v903, %v906
    %v909 = vadd.f32 %v904, %v906
    %910 = vst.msk [vmem:[#allocation3] sm:$0xff] %vm72, %v908
    %911 = vst.msk [vmem:[#allocation3 + $0x8] sm:$0xff] %vm72, %v909
    // Predicated region
    $region58: #{fwd.3} parent=1 // pred_check
      _
    $region59: #{fwd.3} parent=1 // pred_check_branch
      %913 = sbr.rel (0) target = $region61
    $region60: #{fwd.3} parent=1 // pred_region
      %915 = vsyncadd [#allocation4], 0
      %s916 = sshll.u32 [#allocation3], 4
      %s917 = int_to_ptr.vmem [resolvable:$true] %s916
      %s918 = sshll.u32 %s14, 4
      %s919 = int_to_ptr.hbm [resolvable:$true] %s918
      %924 = dma.vmem_to_hbm [thread:$0]  %s917, 256, %s919, [#allocation4], 128, 128, 8
    $region61: #{fwd.3} parent=1 // pred_fallthru
      _
    // Predicated region
    $region62: #{fwd.3} parent=1 // pred_check
      _
    $region63: #{fwd.3} parent=1 // pred_check_branch
      %926 = sbr.rel (0) target = $region65
    $region64: #{fwd.3} parent=1 // pred_region
      %928 = dma.done [#allocation4], 256
    $region65: #{fwd.3} parent=1 // pred_fallthru
      _
    %929 = vsyncpa [#allocation4], 1

</llo_original>
